<compile_context>
chip_gen: v5e
topology: v5e:2x2
jax: 0.10.0
libtpu: 0.0.40
codegen_flags: <defaults>
</compile_context>

<pallas_src>
import math

import jax
import jax.numpy as jnp
from jax.experimental import pallas as pl
from jax.experimental.pallas import tpu as pltpu

# ---- small synthetic BertConfig -------------------------------------------------
H = 32             # hidden size
NH = 4             # attention heads
HD = H // NH       # head dim
FF = 64            # intermediate (FFN) size
VOCAB = 30
MAX_POS = 16
TYPE_VOCAB = 2
N_LAYERS = 2
LN_EPS = 1e-12
SMALL_LANES = 128  # lane width of the packed small-parameter array

# Set to jnp.bfloat16 on v6e/v7x for ~2x MXU rate (accumulation stays f32).
MATMUL_DTYPE = jnp.float32

assert H <= SMALL_LANES and FF <= SMALL_LANES


# ---- shared math helpers (used by kernel AND the pure-JAX reference) --------------
def _layernorm(x, gamma, beta):
    mu = jnp.mean(x, axis=-1, keepdims=True)
    var = jnp.mean(jnp.square(x - mu), axis=-1, keepdims=True)
    return (x - mu) * jax.lax.rsqrt(var + LN_EPS) * gamma + beta


def _erf(x):
    # Abramowitz & Stegun 7.1.26 polynomial, max abs error ~1.5e-7 (only exp/mul/add/select,
    # all of which lower on Mosaic).  Matches nn.GELU's exact erf to ~1e-7.
    a1, a2, a3, a4, a5 = 0.254829592, -0.284496736, 1.421413741, -1.453152027, 1.061405429
    pc = 0.3275911
    ax = jnp.abs(x)
    t = 1.0 / (1.0 + pc * ax)
    poly = ((((a5 * t + a4) * t + a3) * t + a2) * t + a1) * t
    y = 1.0 - poly * jnp.exp(-ax * ax)
    return jnp.where(x >= 0, y, -y)


def _gelu(x):
    return 0.5 * x * (1.0 + _erf(x * (1.0 / math.sqrt(2.0))))


# ---- fused per-batch BERT kernel --------------------------------------------------
def bert_kernel(x_ref, bias_ref, wqkv_ref, bqkv_ref, wo_ref, wff1_ref, wff2_ref,
                smalls_ref, o_ref):
    S, Hh = x_ref.shape
    n_layers = wqkv_ref.shape[0]
    n_heads = wo_ref.shape[1]
    hd = wo_ref.shape[2]
    ff_dim = wff1_ref.shape[2]
    inv_sqrt = 1.0 / math.sqrt(hd)

    # Embedding LayerNorm (word+pos+type sum is done in the JAX wrapper).
    emb_sm = smalls_ref[0]                                           # (8, 128) packed smalls
    x = _layernorm(x_ref[...], emb_sm[0:1, :Hh], emb_sm[1:2, :Hh])   # (S, H) f32

    key_bias = bias_ref[...]                                         # (1, 1, S) additive mask

    # Encoder layers, statically unrolled; activations stay VMEM-resident.
    for l in range(n_layers):
        sm = smalls_ref[l + 1]                                       # (8, 128) packed smalls
        bo = sm[0:1, :Hh]
        ln1g, ln1b = sm[1:2, :Hh], sm[2:3, :Hh]
        bff1 = sm[3:4, :ff_dim]
        bff2 = sm[4:5, :Hh]
        ln2g, ln2b = sm[5:6, :Hh], sm[6:7, :Hh]

        # ---- multi-head self-attention: heads are a leading batch axis -------------
        # Q/K/V projection as one batched matmul over 3*NH head-major weight slabs.
        xb = jnp.broadcast_to(x[None].astype(MATMUL_DTYPE), (3 * n_heads, S, Hh))
        qkv = jnp.einsum('jsk,jkd->jsd', xb, wqkv_ref[l].astype(MATMUL_DTYPE),
                         preferred_element_type=jnp.float32) + bqkv_ref[l]   # (3NH, S, HD)
        q = qkv[0:n_heads]
        k = qkv[n_heads:2 * n_heads]
        v = qkv[2 * n_heads:3 * n_heads]

        sc = jnp.einsum('hqd,hkd->hqk', q, k,
                        preferred_element_type=jnp.float32) * inv_sqrt + key_bias  # (NH,S,S)
        sc = sc - jnp.max(sc, axis=-1, keepdims=True)        # one XLU max across all heads
        p = jnp.exp(sc)
        p = p / jnp.sum(p, axis=-1, keepdims=True)           # exact divide (numeric fidelity)
        ctx = jnp.einsum('hqk,hkd->hqd', p, v,
                         preferred_element_type=jnp.float32)                       # (NH,S,HD)

        # Output projection: per-head (HD, H) slabs of Wo, summed over heads.
        attn_heads = jnp.einsum('hqd,hdo->hqo', ctx.astype(MATMUL_DTYPE),
                                wo_ref[l].astype(MATMUL_DTYPE),
                                preferred_element_type=jnp.float32)                # (NH,S,H)
        attn = attn_heads[0]
        for h_i in range(1, n_heads):
            attn = attn + attn_heads[h_i]
        attn = attn + bo

        h1 = _layernorm(x + attn, ln1g, ln1b)                # residual + LayerNorm

        # ---- feed-forward -----------------------------------------------------------
        ff = _gelu(jnp.dot(h1.astype(MATMUL_DTYPE), wff1_ref[l].astype(MATMUL_DTYPE),
                           preferred_element_type=jnp.float32) + bff1)
        ff = jnp.dot(ff.astype(MATMUL_DTYPE), wff2_ref[l].astype(MATMUL_DTYPE),
                     preferred_element_type=jnp.float32) + bff2
        x = _layernorm(h1 + ff, ln2g, ln2b)                  # residual + LayerNorm

    o_ref[...] = x                                           # (S, H)


# ---- parameters -------------------------------------------------------------------
def init_params(key):
    ks = jax.random.split(key, 4)

    def norm(k, shape, scale=0.02):
        return (scale * jax.random.normal(k, shape)).astype(jnp.float32)

    word_emb = norm(ks[0], (VOCAB, H))
    pos_emb = norm(ks[1], (MAX_POS, H))
    type_emb = norm(ks[2], (TYPE_VOCAB, H))

    def heads_in(w):   # (H, H) -> (NH, H, HD):  heads_in(w)[h] == w[:, h*HD:(h+1)*HD]
        return jnp.transpose(w.reshape(H, NH, HD), (1, 0, 2))

    w_qkv, b_qkv, wo, wff1, wff2 = [], [], [], [], []
    # Packed small params: entry 0 = embedding LayerNorm (row 0 gamma, row 1 beta);
    # entries 1..N per layer: 0 bo | 1 ln1_g | 2 ln1_b | 3 bff1 | 4 bff2 | 5 ln2_g | 6 ln2_b
    smalls = jnp.zeros((N_LAYERS + 1, 8, SMALL_LANES), jnp.float32)
    smalls = smalls.at[0, 0, :H].set(1.0)            # embedding LN gamma (beta stays 0)

    lkeys = jax.random.split(ks[3], N_LAYERS)
    for l in range(N_LAYERS):
        lk = jax.random.split(lkeys[l], 12)
        wq, wk, wv = norm(lk[0], (H, H)), norm(lk[1], (H, H)), norm(lk[2], (H, H))
        bq, bk, bv = norm(lk[3], (H,)), norm(lk[4], (H,)), norm(lk[5], (H,))
        wo_l, bo_l = norm(lk[6], (H, H)), norm(lk[7], (H,))
        wff1_l, bff1_l = norm(lk[8], (H, FF)), norm(lk[9], (FF,))
        wff2_l, bff2_l = norm(lk[10], (FF, H)), norm(lk[11], (H,))

        w_qkv.append(jnp.concatenate([heads_in(wq), heads_in(wk), heads_in(wv)], axis=0))
        b_qkv.append(jnp.concatenate([bq.reshape(NH, 1, HD), bk.reshape(NH, 1, HD),
                                      bv.reshape(NH, 1, HD)], axis=0))          # (3NH,1,HD)
        wo.append(wo_l.reshape(NH, HD, H))                                       # head-major
        wff1.append(wff1_l)
        wff2.append(wff2_l)

        smalls = smalls.at[l + 1, 0, :H].set(bo_l)
        smalls = smalls.at[l + 1, 1, :H].set(1.0)     # ln1 gamma (beta row 2 stays 0)
        smalls = smalls.at[l + 1, 3, :FF].set(bff1_l)
        smalls = smalls.at[l + 1, 4, :H].set(bff2_l)
        smalls = smalls.at[l + 1, 5, :H].set(1.0)     # ln2 gamma (beta row 6 stays 0)

    return dict(word_emb=word_emb, pos_emb=pos_emb, type_emb=type_emb,
                w_qkv=jnp.stack(w_qkv), b_qkv=jnp.stack(b_qkv), wo=jnp.stack(wo),
                wff1=jnp.stack(wff1), wff2=jnp.stack(wff2), smalls=smalls)


# ---- forward (Pallas) ---------------------------------------------------------------
def bert_forward(params, input_ids, token_type_ids=None, attention_mask=None):
    B, S = input_ids.shape
    assert S <= MAX_POS, "sequence length exceeds position-embedding table"
    if attention_mask is None:
        attention_mask = jnp.ones_like(input_ids)
    if token_type_ids is None:
        token_type_ids = jnp.zeros_like(input_ids)

    # JAX glue: data-dependent embedding gathers + sum (XLA fuses these for free).
    emb = (jnp.take(params["word_emb"], input_ids, axis=0)
           + jnp.take(params["type_emb"], token_type_ids, axis=0)
           + params["pos_emb"][:S][None, :, :]).astype(jnp.float32)        # (B, S, H)

    # Standard BERT additive key mask, per batch: (1 - mask) * -10000.
    key_bias = ((1.0 - attention_mask.astype(jnp.float32)) * -10000.0).reshape(B, 1, 1, S)

    # Q/K/V bias pre-broadcast along S in the wrapper (layout plumbing, tiny).
    b_qkv = jnp.broadcast_to(params["b_qkv"], (N_LAYERS, 3 * NH, S, HD))

    out = pl.pallas_call(
        bert_kernel,
        out_shape=jax.ShapeDtypeStruct((B, S, H), jnp.float32),
        grid=(B,),
        in_specs=[
            pl.BlockSpec((None, S, H), lambda b: (b, 0, 0)),            # activations, per batch
            pl.BlockSpec((None, 1, 1, S), lambda b: (b, 0, 0, 0)),      # key bias, per batch
            pl.BlockSpec(params["w_qkv"].shape, lambda b: (0, 0, 0, 0)),  # weights: resident
            pl.BlockSpec(b_qkv.shape, lambda b: (0, 0, 0, 0)),
            pl.BlockSpec(params["wo"].shape, lambda b: (0, 0, 0, 0)),
            pl.BlockSpec(params["wff1"].shape, lambda b: (0, 0, 0)),
            pl.BlockSpec(params["wff2"].shape, lambda b: (0, 0, 0)),
            pl.BlockSpec(params["smalls"].shape, lambda b: (0, 0, 0)),
        ],
        out_specs=pl.BlockSpec((None, S, H), lambda b: (b, 0, 0)),
        compiler_params=pltpu.CompilerParams(dimension_semantics=("parallel",)),
    )(emb, key_bias, params["w_qkv"], b_qkv, params["wo"],
      params["wff1"], params["wff2"], params["smalls"])
    return out


# ---- pure-JAX reference (same math, same params) for a self-check --------------------
def bert_reference(params, input_ids, token_type_ids, attention_mask):
    B, S = input_ids.shape
    emb = (jnp.take(params["word_emb"], input_ids, axis=0)
           + jnp.take(params["type_emb"], token_type_ids, axis=0)
           + params["pos_emb"][:S][None, :, :]).astype(jnp.float32)
    sm0 = params["smalls"][0]
    x = _layernorm(emb, sm0[0, :H], sm0[1, :H])
    bias = ((1.0 - attention_mask.astype(jnp.float32)) * -10000.0)[:, None, None, :]
    inv_sqrt = 1.0 / math.sqrt(HD)
    hi = jax.lax.Precision.HIGHEST
    for l in range(N_LAYERS):
        sm = params["smalls"][l + 1]
        qkv = jnp.einsum('bsk,jkd->bjsd', x, params["w_qkv"][l],
                         precision=hi) + params["b_qkv"][l][None]        # (B, 3NH, S, HD)
        q, k, v = qkv[:, :NH], qkv[:, NH:2 * NH], qkv[:, 2 * NH:]
        sc = jnp.einsum('bhqd,bhkd->bhqk', q, k, precision=hi) * inv_sqrt + bias
        sc = sc - jnp.max(sc, axis=-1, keepdims=True)
        p = jnp.exp(sc)
        p = p / jnp.sum(p, axis=-1, keepdims=True)
        ctx = jnp.einsum('bhqk,bhkd->bhqd', p, v, precision=hi)
        attn = jnp.einsum('bhqd,hdo->bqo', ctx, params["wo"][l], precision=hi) + sm[0, :H]
        h1 = _layernorm(x + attn, sm[1, :H], sm[2, :H])
        ff = _gelu(jnp.einsum('bsh,hf->bsf', h1, params["wff1"][l], precision=hi) + sm[3, :FF])
        ff = jnp.einsum('bsf,fh->bsh', ff, params["wff2"][l], precision=hi) + sm[4, :H]
        x = _layernorm(h1 + ff, sm[5, :H], sm[6, :H])
    return x


if __name__ == "__main__":
    key = jax.random.PRNGKey(0)
    pkey, ikey = jax.random.split(key)
    params = init_params(pkey)

    B, S = 2, 8
    input_ids = jax.random.randint(ikey, (B, S), 0, VOCAB, dtype=jnp.int32)
    token_type_ids = jnp.zeros((B, S), jnp.int32)
    attention_mask = jnp.ones((B, S), jnp.int32)

    out = jax.jit(bert_forward)(params, input_ids, token_type_ids, attention_mask)
    jax.block_until_ready(out)
    assert out.shape == (B, S, H) and out.dtype == jnp.float32

    ref = bert_reference(params, input_ids, token_type_ids, attention_mask)
    max_err = float(jnp.max(jnp.abs(out - ref)))
    assert jnp.allclose(out, ref, atol=1e-3, rtol=1e-3), f"max abs err {max_err}"

    print("KERNEL_OK")
</pallas_src>

<mosaic_0001>
module attributes {stable_mosaic.version = 11 : i64} {
  func.func @bert_kernel(%arg0: i32, %arg1: memref<1x8x32xf32, #tpu.memory_space<vmem>>, %arg2: memref<1x1x1x8xf32, #tpu.memory_space<vmem>>, %arg3: memref<2x12x32x8xf32, #tpu.memory_space<vmem>>, %arg4: memref<2x12x8x8xf32, #tpu.memory_space<vmem>>, %arg5: memref<2x4x8x32xf32, #tpu.memory_space<vmem>>, %arg6: memref<2x32x64xf32, #tpu.memory_space<vmem>>, %arg7: memref<2x64x32xf32, #tpu.memory_space<vmem>>, %arg8: memref<3x8x128xf32, #tpu.memory_space<vmem>>, %arg9: memref<1x8x32xf32, #tpu.memory_space<vmem>>) attributes {dimension_semantics = [#tpu.dimension_semantics<parallel>], iteration_bounds = array<i64: 2>, scalar_prefetch = 0 : i64, scratch_operands = 0 : i64, tpu.core_type = #tpu.core_type<tc>, window_params = [{transform_indices = @transform_0, window_bounds = array<i64: 1, 8, 32>}, {transform_indices = @transform_1, window_bounds = array<i64: 1, 1, 1, 8>}, {pipeline_mode = #tpu.pipeline_mode<synchronous>, transform_indices = @transform_2, window_bounds = array<i64: 2, 12, 32, 8>}, {pipeline_mode = #tpu.pipeline_mode<synchronous>, transform_indices = @transform_3, window_bounds = array<i64: 2, 12, 8, 8>}, {pipeline_mode = #tpu.pipeline_mode<synchronous>, transform_indices = @transform_4, window_bounds = array<i64: 2, 4, 8, 32>}, {pipeline_mode = #tpu.pipeline_mode<synchronous>, transform_indices = @transform_5, window_bounds = array<i64: 2, 32, 64>}, {pipeline_mode = #tpu.pipeline_mode<synchronous>, transform_indices = @transform_6, window_bounds = array<i64: 2, 64, 32>}, {pipeline_mode = #tpu.pipeline_mode<synchronous>, transform_indices = @transform_7, window_bounds = array<i64: 3, 8, 128>}, {transform_indices = @transform_8, window_bounds = array<i64: 1, 8, 32>}]} {
    %c0 = arith.constant 0 : index
    %c0_0 = arith.constant 0 : index
    %c0_1 = arith.constant 0 : index
    %0 = vector.load %arg8[%c0, %c0_0, %c0_1] : memref<3x8x128xf32, #tpu.memory_space<vmem>>, vector<1x8x128xf32>
    %1 = vector.shape_cast %0 : vector<1x8x128xf32> to vector<8x128xf32>
    %c0_2 = arith.constant 0 : index
    %c0_3 = arith.constant 0 : index
    %c0_4 = arith.constant 0 : index
    %2 = vector.load %arg1[%c0_2, %c0_3, %c0_4] : memref<1x8x32xf32, #tpu.memory_space<vmem>>, vector<1x8x32xf32>
    %3 = vector.shape_cast %2 : vector<1x8x32xf32> to vector<8x32xf32>
    %4 = vector.extract_strided_slice %1 {offsets = [0, 0], sizes = [1, 32], strides = [1, 1]} : vector<8x128xf32> to vector<1x32xf32>
    %5 = vector.extract_strided_slice %1 {offsets = [1, 0], sizes = [1, 32], strides = [1, 1]} : vector<8x128xf32> to vector<1x32xf32>
    %cst = arith.constant dense<0.000000e+00> : vector<8xf32>
    %6 = vector.multi_reduction <add>, %3, %cst [1] : vector<8x32xf32> to vector<8xf32>
    %7 = vector.shape_cast %6 : vector<8xf32> to vector<8x1xf32>
    %cst_5 = arith.constant 3.200000e+01 : f32
    %8 = vector.broadcast %cst_5 : f32 to vector<8x1xf32>
    %9 = arith.divf %7, %8 : vector<8x1xf32>
    %10 = vector.broadcast %9 : vector<8x1xf32> to vector<8x32xf32>
    %11 = arith.subf %3, %10 : vector<8x32xf32>
    %12 = arith.mulf %11, %11 : vector<8x32xf32>
    %cst_6 = arith.constant dense<0.000000e+00> : vector<8xf32>
    %13 = vector.multi_reduction <add>, %12, %cst_6 [1] : vector<8x32xf32> to vector<8xf32>
    %14 = vector.shape_cast %13 : vector<8xf32> to vector<8x1xf32>
    %cst_7 = arith.constant 3.200000e+01 : f32
    %15 = vector.broadcast %cst_7 : f32 to vector<8x1xf32>
    %16 = arith.divf %14, %15 : vector<8x1xf32>
    %17 = vector.broadcast %9 : vector<8x1xf32> to vector<8x32xf32>
    %18 = arith.subf %3, %17 : vector<8x32xf32>
    %cst_8 = arith.constant 9.99999996E-13 : f32
    %19 = vector.broadcast %cst_8 : f32 to vector<8x1xf32>
    %20 = arith.addf %16, %19 : vector<8x1xf32>
    %21 = math.rsqrt %20 : vector<8x1xf32>
    %22 = vector.broadcast %21 : vector<8x1xf32> to vector<8x32xf32>
    %23 = arith.mulf %18, %22 : vector<8x32xf32>
    %24 = vector.broadcast %4 : vector<1x32xf32> to vector<8x32xf32>
    %25 = arith.mulf %23, %24 : vector<8x32xf32>
    %26 = vector.broadcast %5 : vector<1x32xf32> to vector<8x32xf32>
    %27 = arith.addf %25, %26 : vector<8x32xf32>
    %c0_9 = arith.constant 0 : index
    %c0_10 = arith.constant 0 : index
    %c0_11 = arith.constant 0 : index
    %c0_12 = arith.constant 0 : index
    %28 = vector.load %arg2[%c0_9, %c0_10, %c0_11, %c0_12] : memref<1x1x1x8xf32, #tpu.memory_space<vmem>>, vector<1x1x1x8xf32>
    %29 = vector.shape_cast %28 : vector<1x1x1x8xf32> to vector<1x1x8xf32>
    %c1 = arith.constant 1 : index
    %c0_13 = arith.constant 0 : index
    %c0_14 = arith.constant 0 : index
    %30 = vector.load %arg8[%c1, %c0_13, %c0_14] : memref<3x8x128xf32, #tpu.memory_space<vmem>>, vector<1x8x128xf32>
    %31 = vector.shape_cast %30 : vector<1x8x128xf32> to vector<8x128xf32>
    %32 = vector.extract_strided_slice %31 {offsets = [0, 0], sizes = [1, 32], strides = [1, 1]} : vector<8x128xf32> to vector<1x32xf32>
    %33 = vector.extract_strided_slice %31 {offsets = [1, 0], sizes = [1, 32], strides = [1, 1]} : vector<8x128xf32> to vector<1x32xf32>
    %34 = vector.extract_strided_slice %31 {offsets = [2, 0], sizes = [1, 32], strides = [1, 1]} : vector<8x128xf32> to vector<1x32xf32>
    %35 = vector.extract_strided_slice %31 {offsets = [3, 0], sizes = [1, 64], strides = [1, 1]} : vector<8x128xf32> to vector<1x64xf32>
    %36 = vector.extract_strided_slice %31 {offsets = [4, 0], sizes = [1, 32], strides = [1, 1]} : vector<8x128xf32> to vector<1x32xf32>
    %37 = vector.extract_strided_slice %31 {offsets = [5, 0], sizes = [1, 32], strides = [1, 1]} : vector<8x128xf32> to vector<1x32xf32>
    %38 = vector.extract_strided_slice %31 {offsets = [6, 0], sizes = [1, 32], strides = [1, 1]} : vector<8x128xf32> to vector<1x32xf32>
    %39 = vector.shape_cast %27 : vector<8x32xf32> to vector<1x8x32xf32>
    %40 = vector.shape_cast %39 : vector<1x8x32xf32> to vector<1x8x32xf32>
    %41 = vector.broadcast %40 : vector<1x8x32xf32> to vector<12x8x32xf32>
    %c0_15 = arith.constant 0 : index
    %c0_16 = arith.constant 0 : index
    %c0_17 = arith.constant 0 : index
    %c0_18 = arith.constant 0 : index
    %42 = vector.load %arg3[%c0_15, %c0_16, %c0_17, %c0_18] : memref<2x12x32x8xf32, #tpu.memory_space<vmem>>, vector<1x12x32x8xf32>
    %43 = vector.shape_cast %42 : vector<1x12x32x8xf32> to vector<12x32x8xf32>
    "tpu.trace_start"() <{level = 10 : i32, message = "jsk,jkd->jsd"}> : () -> ()
    %cst_19 = arith.constant dense<0.000000e+00> : vector<12x8x8xf32>
    %44 = tpu.matmul %41, %43, %cst_19 {dimension_numbers = #tpu.dot_dimension_numbers<[2], [1], [1], [2], [0, 0, 0, 1, 1, 2], [0], [0]>} : vector<12x8x32xf32>, vector<12x32x8xf32>, vector<12x8x8xf32> -> vector<12x8x8xf32>
    "tpu.trace_stop"() : () -> ()
    %c0_20 = arith.constant 0 : index
    %c0_21 = arith.constant 0 : index
    %c0_22 = arith.constant 0 : index
    %c0_23 = arith.constant 0 : index
    %45 = vector.load %arg4[%c0_20, %c0_21, %c0_22, %c0_23] : memref<2x12x8x8xf32, #tpu.memory_space<vmem>>, vector<1x12x8x8xf32>
    %46 = vector.shape_cast %45 : vector<1x12x8x8xf32> to vector<12x8x8xf32>
    %47 = arith.addf %44, %46 : vector<12x8x8xf32>
    %48 = vector.extract_strided_slice %47 {offsets = [0, 0, 0], sizes = [4, 8, 8], strides = [1, 1, 1]} : vector<12x8x8xf32> to vector<4x8x8xf32>
    %49 = vector.extract_strided_slice %47 {offsets = [4, 0, 0], sizes = [4, 8, 8], strides = [1, 1, 1]} : vector<12x8x8xf32> to vector<4x8x8xf32>
    %50 = vector.extract_strided_slice %47 {offsets = [8, 0, 0], sizes = [4, 8, 8], strides = [1, 1, 1]} : vector<12x8x8xf32> to vector<4x8x8xf32>
    "tpu.trace_start"() <{level = 10 : i32, message = "hqd,hkd->hqk"}> : () -> ()
    %cst_24 = arith.constant dense<0.000000e+00> : vector<4x8x8xf32>
    %51 = tpu.matmul %48, %49, %cst_24 {dimension_numbers = #tpu.dot_dimension_numbers<[2], [2], [1], [1], [0, 0, 0, 1, 1, 1], [0], [0]>} : vector<4x8x8xf32>, vector<4x8x8xf32>, vector<4x8x8xf32> -> vector<4x8x8xf32>
    "tpu.trace_stop"() : () -> ()
    %cst_25 = arith.constant 0.353553385 : f32
    %52 = vector.broadcast %cst_25 : f32 to vector<4x8x8xf32>
    %53 = arith.mulf %51, %52 : vector<4x8x8xf32>
    %54 = vector.broadcast %29 : vector<1x1x8xf32> to vector<4x8x8xf32>
    %55 = arith.addf %53, %54 : vector<4x8x8xf32>
    %cst_26 = arith.constant dense<0xFF800000> : vector<4x8xf32>
    %56 = vector.multi_reduction <maximumf>, %55, %cst_26 [2] : vector<4x8x8xf32> to vector<4x8xf32>
    %57 = vector.shape_cast %56 : vector<4x8xf32> to vector<4x8x1xf32>
    %58 = vector.broadcast %57 : vector<4x8x1xf32> to vector<4x8x8xf32>
    %59 = arith.subf %55, %58 : vector<4x8x8xf32>
    %60 = math.exp %59 : vector<4x8x8xf32>
    %cst_27 = arith.constant dense<0.000000e+00> : vector<4x8xf32>
    %61 = vector.multi_reduction <add>, %60, %cst_27 [2] : vector<4x8x8xf32> to vector<4x8xf32>
    %62 = vector.shape_cast %61 : vector<4x8xf32> to vector<4x8x1xf32>
    %63 = vector.broadcast %62 : vector<4x8x1xf32> to vector<4x8x8xf32>
    %64 = arith.divf %60, %63 : vector<4x8x8xf32>
    "tpu.trace_start"() <{level = 10 : i32, message = "hqk,hkd->hqd"}> : () -> ()
    %cst_28 = arith.constant dense<0.000000e+00> : vector<4x8x8xf32>
    %65 = tpu.matmul %64, %50, %cst_28 {dimension_numbers = #tpu.dot_dimension_numbers<[2], [1], [1], [2], [0, 0, 0, 1, 1, 2], [0], [0]>} : vector<4x8x8xf32>, vector<4x8x8xf32>, vector<4x8x8xf32> -> vector<4x8x8xf32>
    "tpu.trace_stop"() : () -> ()
    %c0_29 = arith.constant 0 : index
    %c0_30 = arith.constant 0 : index
    %c0_31 = arith.constant 0 : index
    %c0_32 = arith.constant 0 : index
    %66 = vector.load %arg5[%c0_29, %c0_30, %c0_31, %c0_32] : memref<2x4x8x32xf32, #tpu.memory_space<vmem>>, vector<1x4x8x32xf32>
    %67 = vector.shape_cast %66 : vector<1x4x8x32xf32> to vector<4x8x32xf32>
    "tpu.trace_start"() <{level = 10 : i32, message = "hqd,hdo->hqo"}> : () -> ()
    %cst_33 = arith.constant dense<0.000000e+00> : vector<4x8x32xf32>
    %68 = tpu.matmul %65, %67, %cst_33 {dimension_numbers = #tpu.dot_dimension_numbers<[2], [1], [1], [2], [0, 0, 0, 1, 1, 2], [0], [0]>} : vector<4x8x8xf32>, vector<4x8x32xf32>, vector<4x8x32xf32> -> vector<4x8x32xf32>
    "tpu.trace_stop"() : () -> ()
    %69 = vector.extract_strided_slice %68 {offsets = [0, 0, 0], sizes = [1, 8, 32], strides = [1, 1, 1]} : vector<4x8x32xf32> to vector<1x8x32xf32>
    %70 = vector.shape_cast %69 : vector<1x8x32xf32> to vector<8x32xf32>
    %71 = vector.extract_strided_slice %68 {offsets = [1, 0, 0], sizes = [1, 8, 32], strides = [1, 1, 1]} : vector<4x8x32xf32> to vector<1x8x32xf32>
    %72 = vector.shape_cast %71 : vector<1x8x32xf32> to vector<8x32xf32>
    %73 = arith.addf %70, %72 : vector<8x32xf32>
    %74 = vector.extract_strided_slice %68 {offsets = [2, 0, 0], sizes = [1, 8, 32], strides = [1, 1, 1]} : vector<4x8x32xf32> to vector<1x8x32xf32>
    %75 = vector.shape_cast %74 : vector<1x8x32xf32> to vector<8x32xf32>
    %76 = arith.addf %73, %75 : vector<8x32xf32>
    %77 = vector.extract_strided_slice %68 {offsets = [3, 0, 0], sizes = [1, 8, 32], strides = [1, 1, 1]} : vector<4x8x32xf32> to vector<1x8x32xf32>
    %78 = vector.shape_cast %77 : vector<1x8x32xf32> to vector<8x32xf32>
    %79 = arith.addf %76, %78 : vector<8x32xf32>
    %80 = vector.broadcast %32 : vector<1x32xf32> to vector<8x32xf32>
    %81 = arith.addf %79, %80 : vector<8x32xf32>
    %82 = arith.addf %27, %81 : vector<8x32xf32>
    %cst_34 = arith.constant dense<0.000000e+00> : vector<8xf32>
    %83 = vector.multi_reduction <add>, %82, %cst_34 [1] : vector<8x32xf32> to vector<8xf32>
    %84 = vector.shape_cast %83 : vector<8xf32> to vector<8x1xf32>
    %cst_35 = arith.constant 3.200000e+01 : f32
    %85 = vector.broadcast %cst_35 : f32 to vector<8x1xf32>
    %86 = arith.divf %84, %85 : vector<8x1xf32>
    %87 = vector.broadcast %86 : vector<8x1xf32> to vector<8x32xf32>
    %88 = arith.subf %82, %87 : vector<8x32xf32>
    %89 = arith.mulf %88, %88 : vector<8x32xf32>
    %cst_36 = arith.constant dense<0.000000e+00> : vector<8xf32>
    %90 = vector.multi_reduction <add>, %89, %cst_36 [1] : vector<8x32xf32> to vector<8xf32>
    %91 = vector.shape_cast %90 : vector<8xf32> to vector<8x1xf32>
    %cst_37 = arith.constant 3.200000e+01 : f32
    %92 = vector.broadcast %cst_37 : f32 to vector<8x1xf32>
    %93 = arith.divf %91, %92 : vector<8x1xf32>
    %94 = vector.broadcast %86 : vector<8x1xf32> to vector<8x32xf32>
    %95 = arith.subf %82, %94 : vector<8x32xf32>
    %cst_38 = arith.constant 9.99999996E-13 : f32
    %96 = vector.broadcast %cst_38 : f32 to vector<8x1xf32>
    %97 = arith.addf %93, %96 : vector<8x1xf32>
    %98 = math.rsqrt %97 : vector<8x1xf32>
    %99 = vector.broadcast %98 : vector<8x1xf32> to vector<8x32xf32>
    %100 = arith.mulf %95, %99 : vector<8x32xf32>
    %101 = vector.broadcast %33 : vector<1x32xf32> to vector<8x32xf32>
    %102 = arith.mulf %100, %101 : vector<8x32xf32>
    %103 = vector.broadcast %34 : vector<1x32xf32> to vector<8x32xf32>
    %104 = arith.addf %102, %103 : vector<8x32xf32>
    %c0_39 = arith.constant 0 : index
    %c0_40 = arith.constant 0 : index
    %c0_41 = arith.constant 0 : index
    %105 = vector.load %arg6[%c0_39, %c0_40, %c0_41] : memref<2x32x64xf32, #tpu.memory_space<vmem>>, vector<1x32x64xf32>
    %106 = vector.shape_cast %105 : vector<1x32x64xf32> to vector<32x64xf32>
    %cst_42 = arith.constant dense<0.000000e+00> : vector<8x64xf32>
    %107 = tpu.matmul %104, %106, %cst_42 {dimension_numbers = #tpu.dot_dimension_numbers<[1], [0], [0], [1], [0, 0, 1, 1], [], []>} : vector<8x32xf32>, vector<32x64xf32>, vector<8x64xf32> -> vector<8x64xf32>
    %108 = vector.broadcast %35 : vector<1x64xf32> to vector<8x64xf32>
    %109 = arith.addf %107, %108 : vector<8x64xf32>
    %cst_43 = arith.constant 5.000000e-01 : f32
    %110 = vector.broadcast %cst_43 : f32 to vector<8x64xf32>
    %111 = arith.mulf %110, %109 : vector<8x64xf32>
    %cst_44 = arith.constant 0.707106769 : f32
    %112 = vector.broadcast %cst_44 : f32 to vector<8x64xf32>
    %113 = arith.mulf %109, %112 : vector<8x64xf32>
    %114 = math.absf %113 : vector<8x64xf32>
    %cst_45 = arith.constant 0.327591091 : f32
    %115 = vector.broadcast %cst_45 : f32 to vector<8x64xf32>
    %116 = arith.mulf %115, %114 : vector<8x64xf32>
    %cst_46 = arith.constant 1.000000e+00 : f32
    %117 = vector.broadcast %cst_46 : f32 to vector<8x64xf32>
    %118 = arith.addf %117, %116 : vector<8x64xf32>
    %cst_47 = arith.constant 1.000000e+00 : f32
    %119 = vector.broadcast %cst_47 : f32 to vector<8x64xf32>
    %120 = arith.divf %119, %118 : vector<8x64xf32>
    %cst_48 = arith.constant 1.06140542 : f32
    %121 = vector.broadcast %cst_48 : f32 to vector<8x64xf32>
    %122 = arith.mulf %121, %120 : vector<8x64xf32>
    %cst_49 = arith.constant -1.45315206 : f32
    %123 = vector.broadcast %cst_49 : f32 to vector<8x64xf32>
    %124 = arith.addf %122, %123 : vector<8x64xf32>
    %125 = arith.mulf %124, %120 : vector<8x64xf32>
    %cst_50 = arith.constant 1.42141378 : f32
    %126 = vector.broadcast %cst_50 : f32 to vector<8x64xf32>
    %127 = arith.addf %125, %126 : vector<8x64xf32>
    %128 = arith.mulf %127, %120 : vector<8x64xf32>
    %cst_51 = arith.constant -0.284496725 : f32
    %129 = vector.broadcast %cst_51 : f32 to vector<8x64xf32>
    %130 = arith.addf %128, %129 : vector<8x64xf32>
    %131 = arith.mulf %130, %120 : vector<8x64xf32>
    %cst_52 = arith.constant 0.254829586 : f32
    %132 = vector.broadcast %cst_52 : f32 to vector<8x64xf32>
    %133 = arith.addf %131, %132 : vector<8x64xf32>
    %134 = arith.mulf %133, %120 : vector<8x64xf32>
    %cst_53 = arith.constant 0.000000e+00 : f32
    %135 = vector.broadcast %cst_53 : f32 to vector<8x64xf32>
    %136 = arith.subf %135, %114 : vector<8x64xf32>
    %137 = arith.mulf %136, %114 : vector<8x64xf32>
    %138 = math.exp %137 : vector<8x64xf32>
    %139 = arith.mulf %134, %138 : vector<8x64xf32>
    %cst_54 = arith.constant 1.000000e+00 : f32
    %140 = vector.broadcast %cst_54 : f32 to vector<8x64xf32>
    %141 = arith.subf %140, %139 : vector<8x64xf32>
    %cst_55 = arith.constant 0.000000e+00 : f32
    %142 = vector.broadcast %cst_55 : f32 to vector<8x64xf32>
    %143 = arith.cmpf oge, %113, %142 : vector<8x64xf32>
    %cst_56 = arith.constant 0.000000e+00 : f32
    %144 = vector.broadcast %cst_56 : f32 to vector<8x64xf32>
    %145 = arith.subf %144, %141 : vector<8x64xf32>
    %146 = arith.select %143, %141, %145 : vector<8x64xi1>, vector<8x64xf32>
    %cst_57 = arith.constant 1.000000e+00 : f32
    %147 = vector.broadcast %cst_57 : f32 to vector<8x64xf32>
    %148 = arith.addf %147, %146 : vector<8x64xf32>
    %149 = arith.mulf %111, %148 : vector<8x64xf32>
    %c0_58 = arith.constant 0 : index
    %c0_59 = arith.constant 0 : index
    %c0_60 = arith.constant 0 : index
    %150 = vector.load %arg7[%c0_58, %c0_59, %c0_60] : memref<2x64x32xf32, #tpu.memory_space<vmem>>, vector<1x64x32xf32>
    %151 = vector.shape_cast %150 : vector<1x64x32xf32> to vector<64x32xf32>
    %cst_61 = arith.constant dense<0.000000e+00> : vector<8x32xf32>
    %152 = tpu.matmul %149, %151, %cst_61 {dimension_numbers = #tpu.dot_dimension_numbers<[1], [0], [0], [1], [0, 0, 1, 1], [], []>} : vector<8x64xf32>, vector<64x32xf32>, vector<8x32xf32> -> vector<8x32xf32>
    %153 = vector.broadcast %36 : vector<1x32xf32> to vector<8x32xf32>
    %154 = arith.addf %152, %153 : vector<8x32xf32>
    %155 = arith.addf %104, %154 : vector<8x32xf32>
    %cst_62 = arith.constant dense<0.000000e+00> : vector<8xf32>
    %156 = vector.multi_reduction <add>, %155, %cst_62 [1] : vector<8x32xf32> to vector<8xf32>
    %157 = vector.shape_cast %156 : vector<8xf32> to vector<8x1xf32>
    %cst_63 = arith.constant 3.200000e+01 : f32
    %158 = vector.broadcast %cst_63 : f32 to vector<8x1xf32>
    %159 = arith.divf %157, %158 : vector<8x1xf32>
    %160 = vector.broadcast %159 : vector<8x1xf32> to vector<8x32xf32>
    %161 = arith.subf %155, %160 : vector<8x32xf32>
    %162 = arith.mulf %161, %161 : vector<8x32xf32>
    %cst_64 = arith.constant dense<0.000000e+00> : vector<8xf32>
    %163 = vector.multi_reduction <add>, %162, %cst_64 [1] : vector<8x32xf32> to vector<8xf32>
    %164 = vector.shape_cast %163 : vector<8xf32> to vector<8x1xf32>
    %cst_65 = arith.constant 3.200000e+01 : f32
    %165 = vector.broadcast %cst_65 : f32 to vector<8x1xf32>
    %166 = arith.divf %164, %165 : vector<8x1xf32>
    %167 = vector.broadcast %159 : vector<8x1xf32> to vector<8x32xf32>
    %168 = arith.subf %155, %167 : vector<8x32xf32>
    %cst_66 = arith.constant 9.99999996E-13 : f32
    %169 = vector.broadcast %cst_66 : f32 to vector<8x1xf32>
    %170 = arith.addf %166, %169 : vector<8x1xf32>
    %171 = math.rsqrt %170 : vector<8x1xf32>
    %172 = vector.broadcast %171 : vector<8x1xf32> to vector<8x32xf32>
    %173 = arith.mulf %168, %172 : vector<8x32xf32>
    %174 = vector.broadcast %37 : vector<1x32xf32> to vector<8x32xf32>
    %175 = arith.mulf %173, %174 : vector<8x32xf32>
    %176 = vector.broadcast %38 : vector<1x32xf32> to vector<8x32xf32>
    %177 = arith.addf %175, %176 : vector<8x32xf32>
    %c2 = arith.constant 2 : index
    %c0_67 = arith.constant 0 : index
    %c0_68 = arith.constant 0 : index
    %178 = vector.load %arg8[%c2, %c0_67, %c0_68] : memref<3x8x128xf32, #tpu.memory_space<vmem>>, vector<1x8x128xf32>
    %179 = vector.shape_cast %178 : vector<1x8x128xf32> to vector<8x128xf32>
    %180 = vector.extract_strided_slice %179 {offsets = [0, 0], sizes = [1, 32], strides = [1, 1]} : vector<8x128xf32> to vector<1x32xf32>
    %181 = vector.extract_strided_slice %179 {offsets = [1, 0], sizes = [1, 32], strides = [1, 1]} : vector<8x128xf32> to vector<1x32xf32>
    %182 = vector.extract_strided_slice %179 {offsets = [2, 0], sizes = [1, 32], strides = [1, 1]} : vector<8x128xf32> to vector<1x32xf32>
    %183 = vector.extract_strided_slice %179 {offsets = [3, 0], sizes = [1, 64], strides = [1, 1]} : vector<8x128xf32> to vector<1x64xf32>
    %184 = vector.extract_strided_slice %179 {offsets = [4, 0], sizes = [1, 32], strides = [1, 1]} : vector<8x128xf32> to vector<1x32xf32>
    %185 = vector.extract_strided_slice %179 {offsets = [5, 0], sizes = [1, 32], strides = [1, 1]} : vector<8x128xf32> to vector<1x32xf32>
    %186 = vector.extract_strided_slice %179 {offsets = [6, 0], sizes = [1, 32], strides = [1, 1]} : vector<8x128xf32> to vector<1x32xf32>
    %187 = vector.shape_cast %177 : vector<8x32xf32> to vector<1x8x32xf32>
    %188 = vector.shape_cast %187 : vector<1x8x32xf32> to vector<1x8x32xf32>
    %189 = vector.broadcast %188 : vector<1x8x32xf32> to vector<12x8x32xf32>
    %c1_69 = arith.constant 1 : index
    %c0_70 = arith.constant 0 : index
    %c0_71 = arith.constant 0 : index
    %c0_72 = arith.constant 0 : index
    %190 = vector.load %arg3[%c1_69, %c0_70, %c0_71, %c0_72] : memref<2x12x32x8xf32, #tpu.memory_space<vmem>>, vector<1x12x32x8xf32>
    %191 = vector.shape_cast %190 : vector<1x12x32x8xf32> to vector<12x32x8xf32>
    "tpu.trace_start"() <{level = 10 : i32, message = "jsk,jkd->jsd"}> : () -> ()
    %cst_73 = arith.constant dense<0.000000e+00> : vector<12x8x8xf32>
    %192 = tpu.matmul %189, %191, %cst_73 {dimension_numbers = #tpu.dot_dimension_numbers<[2], [1], [1], [2], [0, 0, 0, 1, 1, 2], [0], [0]>} : vector<12x8x32xf32>, vector<12x32x8xf32>, vector<12x8x8xf32> -> vector<12x8x8xf32>
    "tpu.trace_stop"() : () -> ()
    %c1_74 = arith.constant 1 : index
    %c0_75 = arith.constant 0 : index
    %c0_76 = arith.constant 0 : index
    %c0_77 = arith.constant 0 : index
    %193 = vector.load %arg4[%c1_74, %c0_75, %c0_76, %c0_77] : memref<2x12x8x8xf32, #tpu.memory_space<vmem>>, vector<1x12x8x8xf32>
    %194 = vector.shape_cast %193 : vector<1x12x8x8xf32> to vector<12x8x8xf32>
    %195 = arith.addf %192, %194 : vector<12x8x8xf32>
    %196 = vector.extract_strided_slice %195 {offsets = [0, 0, 0], sizes = [4, 8, 8], strides = [1, 1, 1]} : vector<12x8x8xf32> to vector<4x8x8xf32>
    %197 = vector.extract_strided_slice %195 {offsets = [4, 0, 0], sizes = [4, 8, 8], strides = [1, 1, 1]} : vector<12x8x8xf32> to vector<4x8x8xf32>
    %198 = vector.extract_strided_slice %195 {offsets = [8, 0, 0], sizes = [4, 8, 8], strides = [1, 1, 1]} : vector<12x8x8xf32> to vector<4x8x8xf32>
    "tpu.trace_start"() <{level = 10 : i32, message = "hqd,hkd->hqk"}> : () -> ()
    %cst_78 = arith.constant dense<0.000000e+00> : vector<4x8x8xf32>
    %199 = tpu.matmul %196, %197, %cst_78 {dimension_numbers = #tpu.dot_dimension_numbers<[2], [2], [1], [1], [0, 0, 0, 1, 1, 1], [0], [0]>} : vector<4x8x8xf32>, vector<4x8x8xf32>, vector<4x8x8xf32> -> vector<4x8x8xf32>
    "tpu.trace_stop"() : () -> ()
    %cst_79 = arith.constant 0.353553385 : f32
    %200 = vector.broadcast %cst_79 : f32 to vector<4x8x8xf32>
    %201 = arith.mulf %199, %200 : vector<4x8x8xf32>
    %202 = vector.broadcast %29 : vector<1x1x8xf32> to vector<4x8x8xf32>
    %203 = arith.addf %201, %202 : vector<4x8x8xf32>
    %cst_80 = arith.constant dense<0xFF800000> : vector<4x8xf32>
    %204 = vector.multi_reduction <maximumf>, %203, %cst_80 [2] : vector<4x8x8xf32> to vector<4x8xf32>
    %205 = vector.shape_cast %204 : vector<4x8xf32> to vector<4x8x1xf32>
    %206 = vector.broadcast %205 : vector<4x8x1xf32> to vector<4x8x8xf32>
    %207 = arith.subf %203, %206 : vector<4x8x8xf32>
    %208 = math.exp %207 : vector<4x8x8xf32>
    %cst_81 = arith.constant dense<0.000000e+00> : vector<4x8xf32>
    %209 = vector.multi_reduction <add>, %208, %cst_81 [2] : vector<4x8x8xf32> to vector<4x8xf32>
    %210 = vector.shape_cast %209 : vector<4x8xf32> to vector<4x8x1xf32>
    %211 = vector.broadcast %210 : vector<4x8x1xf32> to vector<4x8x8xf32>
    %212 = arith.divf %208, %211 : vector<4x8x8xf32>
    "tpu.trace_start"() <{level = 10 : i32, message = "hqk,hkd->hqd"}> : () -> ()
    %cst_82 = arith.constant dense<0.000000e+00> : vector<4x8x8xf32>
    %213 = tpu.matmul %212, %198, %cst_82 {dimension_numbers = #tpu.dot_dimension_numbers<[2], [1], [1], [2], [0, 0, 0, 1, 1, 2], [0], [0]>} : vector<4x8x8xf32>, vector<4x8x8xf32>, vector<4x8x8xf32> -> vector<4x8x8xf32>
    "tpu.trace_stop"() : () -> ()
    %c1_83 = arith.constant 1 : index
    %c0_84 = arith.constant 0 : index
    %c0_85 = arith.constant 0 : index
    %c0_86 = arith.constant 0 : index
    %214 = vector.load %arg5[%c1_83, %c0_84, %c0_85, %c0_86] : memref<2x4x8x32xf32, #tpu.memory_space<vmem>>, vector<1x4x8x32xf32>
    %215 = vector.shape_cast %214 : vector<1x4x8x32xf32> to vector<4x8x32xf32>
    "tpu.trace_start"() <{level = 10 : i32, message = "hqd,hdo->hqo"}> : () -> ()
    %cst_87 = arith.constant dense<0.000000e+00> : vector<4x8x32xf32>
    %216 = tpu.matmul %213, %215, %cst_87 {dimension_numbers = #tpu.dot_dimension_numbers<[2], [1], [1], [2], [0, 0, 0, 1, 1, 2], [0], [0]>} : vector<4x8x8xf32>, vector<4x8x32xf32>, vector<4x8x32xf32> -> vector<4x8x32xf32>
    "tpu.trace_stop"() : () -> ()
    %217 = vector.extract_strided_slice %216 {offsets = [0, 0, 0], sizes = [1, 8, 32], strides = [1, 1, 1]} : vector<4x8x32xf32> to vector<1x8x32xf32>
    %218 = vector.shape_cast %217 : vector<1x8x32xf32> to vector<8x32xf32>
    %219 = vector.extract_strided_slice %216 {offsets = [1, 0, 0], sizes = [1, 8, 32], strides = [1, 1, 1]} : vector<4x8x32xf32> to vector<1x8x32xf32>
    %220 = vector.shape_cast %219 : vector<1x8x32xf32> to vector<8x32xf32>
    %221 = arith.addf %218, %220 : vector<8x32xf32>
    %222 = vector.extract_strided_slice %216 {offsets = [2, 0, 0], sizes = [1, 8, 32], strides = [1, 1, 1]} : vector<4x8x32xf32> to vector<1x8x32xf32>
    %223 = vector.shape_cast %222 : vector<1x8x32xf32> to vector<8x32xf32>
    %224 = arith.addf %221, %223 : vector<8x32xf32>
    %225 = vector.extract_strided_slice %216 {offsets = [3, 0, 0], sizes = [1, 8, 32], strides = [1, 1, 1]} : vector<4x8x32xf32> to vector<1x8x32xf32>
    %226 = vector.shape_cast %225 : vector<1x8x32xf32> to vector<8x32xf32>
    %227 = arith.addf %224, %226 : vector<8x32xf32>
    %228 = vector.broadcast %180 : vector<1x32xf32> to vector<8x32xf32>
    %229 = arith.addf %227, %228 : vector<8x32xf32>
    %230 = arith.addf %177, %229 : vector<8x32xf32>
    %cst_88 = arith.constant dense<0.000000e+00> : vector<8xf32>
    %231 = vector.multi_reduction <add>, %230, %cst_88 [1] : vector<8x32xf32> to vector<8xf32>
    %232 = vector.shape_cast %231 : vector<8xf32> to vector<8x1xf32>
    %cst_89 = arith.constant 3.200000e+01 : f32
    %233 = vector.broadcast %cst_89 : f32 to vector<8x1xf32>
    %234 = arith.divf %232, %233 : vector<8x1xf32>
    %235 = vector.broadcast %234 : vector<8x1xf32> to vector<8x32xf32>
    %236 = arith.subf %230, %235 : vector<8x32xf32>
    %237 = arith.mulf %236, %236 : vector<8x32xf32>
    %cst_90 = arith.constant dense<0.000000e+00> : vector<8xf32>
    %238 = vector.multi_reduction <add>, %237, %cst_90 [1] : vector<8x32xf32> to vector<8xf32>
    %239 = vector.shape_cast %238 : vector<8xf32> to vector<8x1xf32>
    %cst_91 = arith.constant 3.200000e+01 : f32
    %240 = vector.broadcast %cst_91 : f32 to vector<8x1xf32>
    %241 = arith.divf %239, %240 : vector<8x1xf32>
    %242 = vector.broadcast %234 : vector<8x1xf32> to vector<8x32xf32>
    %243 = arith.subf %230, %242 : vector<8x32xf32>
    %cst_92 = arith.constant 9.99999996E-13 : f32
    %244 = vector.broadcast %cst_92 : f32 to vector<8x1xf32>
    %245 = arith.addf %241, %244 : vector<8x1xf32>
    %246 = math.rsqrt %245 : vector<8x1xf32>
    %247 = vector.broadcast %246 : vector<8x1xf32> to vector<8x32xf32>
    %248 = arith.mulf %243, %247 : vector<8x32xf32>
    %249 = vector.broadcast %181 : vector<1x32xf32> to vector<8x32xf32>
    %250 = arith.mulf %248, %249 : vector<8x32xf32>
    %251 = vector.broadcast %182 : vector<1x32xf32> to vector<8x32xf32>
    %252 = arith.addf %250, %251 : vector<8x32xf32>
    %c1_93 = arith.constant 1 : index
    %c0_94 = arith.constant 0 : index
    %c0_95 = arith.constant 0 : index
    %253 = vector.load %arg6[%c1_93, %c0_94, %c0_95] : memref<2x32x64xf32, #tpu.memory_space<vmem>>, vector<1x32x64xf32>
    %254 = vector.shape_cast %253 : vector<1x32x64xf32> to vector<32x64xf32>
    %cst_96 = arith.constant dense<0.000000e+00> : vector<8x64xf32>
    %255 = tpu.matmul %252, %254, %cst_96 {dimension_numbers = #tpu.dot_dimension_numbers<[1], [0], [0], [1], [0, 0, 1, 1], [], []>} : vector<8x32xf32>, vector<32x64xf32>, vector<8x64xf32> -> vector<8x64xf32>
    %256 = vector.broadcast %183 : vector<1x64xf32> to vector<8x64xf32>
    %257 = arith.addf %255, %256 : vector<8x64xf32>
    %cst_97 = arith.constant 5.000000e-01 : f32
    %258 = vector.broadcast %cst_97 : f32 to vector<8x64xf32>
    %259 = arith.mulf %258, %257 : vector<8x64xf32>
    %cst_98 = arith.constant 0.707106769 : f32
    %260 = vector.broadcast %cst_98 : f32 to vector<8x64xf32>
    %261 = arith.mulf %257, %260 : vector<8x64xf32>
    %262 = math.absf %261 : vector<8x64xf32>
    %cst_99 = arith.constant 0.327591091 : f32
    %263 = vector.broadcast %cst_99 : f32 to vector<8x64xf32>
    %264 = arith.mulf %263, %262 : vector<8x64xf32>
    %cst_100 = arith.constant 1.000000e+00 : f32
    %265 = vector.broadcast %cst_100 : f32 to vector<8x64xf32>
    %266 = arith.addf %265, %264 : vector<8x64xf32>
    %cst_101 = arith.constant 1.000000e+00 : f32
    %267 = vector.broadcast %cst_101 : f32 to vector<8x64xf32>
    %268 = arith.divf %267, %266 : vector<8x64xf32>
    %cst_102 = arith.constant 1.06140542 : f32
    %269 = vector.broadcast %cst_102 : f32 to vector<8x64xf32>
    %270 = arith.mulf %269, %268 : vector<8x64xf32>
    %cst_103 = arith.constant -1.45315206 : f32
    %271 = vector.broadcast %cst_103 : f32 to vector<8x64xf32>
    %272 = arith.addf %270, %271 : vector<8x64xf32>
    %273 = arith.mulf %272, %268 : vector<8x64xf32>
    %cst_104 = arith.constant 1.42141378 : f32
    %274 = vector.broadcast %cst_104 : f32 to vector<8x64xf32>
    %275 = arith.addf %273, %274 : vector<8x64xf32>
    %276 = arith.mulf %275, %268 : vector<8x64xf32>
    %cst_105 = arith.constant -0.284496725 : f32
    %277 = vector.broadcast %cst_105 : f32 to vector<8x64xf32>
    %278 = arith.addf %276, %277 : vector<8x64xf32>
    %279 = arith.mulf %278, %268 : vector<8x64xf32>
    %cst_106 = arith.constant 0.254829586 : f32
    %280 = vector.broadcast %cst_106 : f32 to vector<8x64xf32>
    %281 = arith.addf %279, %280 : vector<8x64xf32>
    %282 = arith.mulf %281, %268 : vector<8x64xf32>
    %cst_107 = arith.constant 0.000000e+00 : f32
    %283 = vector.broadcast %cst_107 : f32 to vector<8x64xf32>
    %284 = arith.subf %283, %262 : vector<8x64xf32>
    %285 = arith.mulf %284, %262 : vector<8x64xf32>
    %286 = math.exp %285 : vector<8x64xf32>
    %287 = arith.mulf %282, %286 : vector<8x64xf32>
    %cst_108 = arith.constant 1.000000e+00 : f32
    %288 = vector.broadcast %cst_108 : f32 to vector<8x64xf32>
    %289 = arith.subf %288, %287 : vector<8x64xf32>
    %cst_109 = arith.constant 0.000000e+00 : f32
    %290 = vector.broadcast %cst_109 : f32 to vector<8x64xf32>
    %291 = arith.cmpf oge, %261, %290 : vector<8x64xf32>
    %cst_110 = arith.constant 0.000000e+00 : f32
    %292 = vector.broadcast %cst_110 : f32 to vector<8x64xf32>
    %293 = arith.subf %292, %289 : vector<8x64xf32>
    %294 = arith.select %291, %289, %293 : vector<8x64xi1>, vector<8x64xf32>
    %cst_111 = arith.constant 1.000000e+00 : f32
    %295 = vector.broadcast %cst_111 : f32 to vector<8x64xf32>
    %296 = arith.addf %295, %294 : vector<8x64xf32>
    %297 = arith.mulf %259, %296 : vector<8x64xf32>
    %c1_112 = arith.constant 1 : index
    %c0_113 = arith.constant 0 : index
    %c0_114 = arith.constant 0 : index
    %298 = vector.load %arg7[%c1_112, %c0_113, %c0_114] : memref<2x64x32xf32, #tpu.memory_space<vmem>>, vector<1x64x32xf32>
    %299 = vector.shape_cast %298 : vector<1x64x32xf32> to vector<64x32xf32>
    %cst_115 = arith.constant dense<0.000000e+00> : vector<8x32xf32>
    %300 = tpu.matmul %297, %299, %cst_115 {dimension_numbers = #tpu.dot_dimension_numbers<[1], [0], [0], [1], [0, 0, 1, 1], [], []>} : vector<8x64xf32>, vector<64x32xf32>, vector<8x32xf32> -> vector<8x32xf32>
    %301 = vector.broadcast %184 : vector<1x32xf32> to vector<8x32xf32>
    %302 = arith.addf %300, %301 : vector<8x32xf32>
    %303 = arith.addf %252, %302 : vector<8x32xf32>
    %cst_116 = arith.constant dense<0.000000e+00> : vector<8xf32>
    %304 = vector.multi_reduction <add>, %303, %cst_116 [1] : vector<8x32xf32> to vector<8xf32>
    %305 = vector.shape_cast %304 : vector<8xf32> to vector<8x1xf32>
    %cst_117 = arith.constant 3.200000e+01 : f32
    %306 = vector.broadcast %cst_117 : f32 to vector<8x1xf32>
    %307 = arith.divf %305, %306 : vector<8x1xf32>
    %308 = vector.broadcast %307 : vector<8x1xf32> to vector<8x32xf32>
    %309 = arith.subf %303, %308 : vector<8x32xf32>
    %310 = arith.mulf %309, %309 : vector<8x32xf32>
    %cst_118 = arith.constant dense<0.000000e+00> : vector<8xf32>
    %311 = vector.multi_reduction <add>, %310, %cst_118 [1] : vector<8x32xf32> to vector<8xf32>
    %312 = vector.shape_cast %311 : vector<8xf32> to vector<8x1xf32>
    %cst_119 = arith.constant 3.200000e+01 : f32
    %313 = vector.broadcast %cst_119 : f32 to vector<8x1xf32>
    %314 = arith.divf %312, %313 : vector<8x1xf32>
    %315 = vector.broadcast %307 : vector<8x1xf32> to vector<8x32xf32>
    %316 = arith.subf %303, %315 : vector<8x32xf32>
    %cst_120 = arith.constant 9.99999996E-13 : f32
    %317 = vector.broadcast %cst_120 : f32 to vector<8x1xf32>
    %318 = arith.addf %314, %317 : vector<8x1xf32>
    %319 = math.rsqrt %318 : vector<8x1xf32>
    %320 = vector.broadcast %319 : vector<8x1xf32> to vector<8x32xf32>
    %321 = arith.mulf %316, %320 : vector<8x32xf32>
    %322 = vector.broadcast %185 : vector<1x32xf32> to vector<8x32xf32>
    %323 = arith.mulf %321, %322 : vector<8x32xf32>
    %324 = vector.broadcast %186 : vector<1x32xf32> to vector<8x32xf32>
    %325 = arith.addf %323, %324 : vector<8x32xf32>
    %c0_121 = arith.constant 0 : index
    %c0_122 = arith.constant 0 : index
    %c0_123 = arith.constant 0 : index
    %326 = vector.load %arg9[%c0_121, %c0_122, %c0_123] : memref<1x8x32xf32, #tpu.memory_space<vmem>>, vector<1x8x32xf32>
    %327 = vector.shape_cast %326 : vector<1x8x32xf32> to vector<8x32xf32>
    %328 = vector.shape_cast %325 : vector<8x32xf32> to vector<1x8x32xf32>
    tpu.vector_store %arg9[%c0_121, %c0_122, %c0_123], %328 {strides = array<i32>} : memref<1x8x32xf32, #tpu.memory_space<vmem>>, vector<1x8x32xf32>,
    return
  }
  func.func @transform_0(%arg0: i32) -> (i32, i32, i32) {
    %c0_i32 = arith.constant 0 : i32
    %c0_i32_0 = arith.constant 0 : i32
    %c0_i32_1 = arith.constant 0 : i32
    return %arg0, %c0_i32, %c0_i32_0 : i32, i32, i32
  }
  func.func @transform_1(%arg0: i32) -> (i32, i32, i32, i32) {
    %c0_i32 = arith.constant 0 : i32
    %c0_i32_0 = arith.constant 0 : i32
    %c0_i32_1 = arith.constant 0 : i32
    %c0_i32_2 = arith.constant 0 : i32
    return %arg0, %c0_i32, %c0_i32_0, %c0_i32_1 : i32, i32, i32, i32
  }
  func.func @transform_2(%arg0: i32) -> (i32, i32, i32, i32) {
    %c0_i32 = arith.constant 0 : i32
    %c0_i32_0 = arith.constant 0 : i32
    %c0_i32_1 = arith.constant 0 : i32
    %c0_i32_2 = arith.constant 0 : i32
    %c0_i32_3 = arith.constant 0 : i32
    return %c0_i32, %c0_i32_0, %c0_i32_1, %c0_i32_2 : i32, i32, i32, i32
  }
  func.func @transform_3(%arg0: i32) -> (i32, i32, i32, i32) {
    %c0_i32 = arith.constant 0 : i32
    %c0_i32_0 = arith.constant 0 : i32
    %c0_i32_1 = arith.constant 0 : i32
    %c0_i32_2 = arith.constant 0 : i32
    %c0_i32_3 = arith.constant 0 : i32
    return %c0_i32, %c0_i32_0, %c0_i32_1, %c0_i32_2 : i32, i32, i32, i32
  }
  func.func @transform_4(%arg0: i32) -> (i32, i32, i32, i32) {
    %c0_i32 = arith.constant 0 : i32
    %c0_i32_0 = arith.constant 0 : i32
    %c0_i32_1 = arith.constant 0 : i32
    %c0_i32_2 = arith.constant 0 : i32
    %c0_i32_3 = arith.constant 0 : i32
    return %c0_i32, %c0_i32_0, %c0_i32_1, %c0_i32_2 : i32, i32, i32, i32
  }
  func.func @transform_5(%arg0: i32) -> (i32, i32, i32) {
    %c0_i32 = arith.constant 0 : i32
    %c0_i32_0 = arith.constant 0 : i32
    %c0_i32_1 = arith.constant 0 : i32
    %c0_i32_2 = arith.constant 0 : i32
    return %c0_i32, %c0_i32_0, %c0_i32_1 : i32, i32, i32
  }
  func.func @transform_6(%arg0: i32) -> (i32, i32, i32) {
    %c0_i32 = arith.constant 0 : i32
    %c0_i32_0 = arith.constant 0 : i32
    %c0_i32_1 = arith.constant 0 : i32
    %c0_i32_2 = arith.constant 0 : i32
    return %c0_i32, %c0_i32_0, %c0_i32_1 : i32, i32, i32
  }
  func.func @transform_7(%arg0: i32) -> (i32, i32, i32) {
    %c0_i32 = arith.constant 0 : i32
    %c0_i32_0 = arith.constant 0 : i32
    %c0_i32_1 = arith.constant 0 : i32
    %c0_i32_2 = arith.constant 0 : i32
    return %c0_i32, %c0_i32_0, %c0_i32_1 : i32, i32, i32
  }
  func.func @transform_8(%arg0: i32) -> (i32, i32, i32) {
    %c0_i32 = arith.constant 0 : i32
    %c0_i32_0 = arith.constant 0 : i32
    %c0_i32_1 = arith.constant 0 : i32
    return %arg0, %c0_i32, %c0_i32_0 : i32, i32, i32
  }
}

</mosaic_0001>

<llo_original>
// kernel: bert_forward.1
$region0: #{bert_forward.1}
  #allocation0 [shape = 'u32[]', space=smem, size = 0x4, offset = 0x4, fixed_abs, tag = 'smem constant byte address 0x4 - core index']
  #allocation1 [shape = 'u32[72,128]{1,0:T(1,128)}', space=vmem, size = 0x9000, scoped, tag = 'internal scratch']
  %s0 = inlined_call_operand.vmem [shape: f32[2,8,32], index: 0, kind: input, shape index: {}]
  %s1 = inlined_call_operand.vmem [shape: f32[2,1,1,8], index: 1, kind: input, shape index: {}]
  %s2 = inlined_call_operand.vmem [shape: f32[2,12,32,8], index: 2, kind: input, shape index: {}]
  %s3 = inlined_call_operand.vmem [shape: f32[2,12,8,8], index: 3, kind: input, shape index: {}]
  %s4 = inlined_call_operand.vmem [shape: f32[2,4,8,32], index: 4, kind: input, shape index: {}]
  %s5 = inlined_call_operand.vmem [shape: f32[2,32,64], index: 5, kind: input, shape index: {}]
  %s6 = inlined_call_operand.vmem [shape: f32[2,64,32], index: 6, kind: input, shape index: {}]
  %s7 = inlined_call_operand.vmem [shape: f32[3,8,128], index: 7, kind: input, shape index: {}]
  %s8 = inlined_call_operand.hbm [shape: f32[2,8,32], index: 8, kind: output, shape index: {}]
  %s9 = sld [smem:[#allocation0]]
  $region65: #{bert_forward.1} parent=0
    _
  %s11 = ssub.s32 1, %s9
  %s12 = scalar_select 0, %s11, %s9
  $region1: #{bert_forward.1} parent=0
    #allocation2 [shape = 'u8[8192]{0}', space=vmem, size = 0x2000, scoped, tag = 'output window, operand 0']
    #allocation3 [shape = 's32[2]{0}', space=sflag, size = 0x8, scoped, tag = 'scoped memory for bert_forward.1']
    %13 = vsyncpa [#allocation3], 0
    %s14 = scalar_lea.sflag [#allocation3], 1
    %15 = vsyncpa %s14, 0
    loop: start=0, step=1, limit=4
    $region2: #{bert_forward.1} parent=1 // loop_pre_header
      _
    $region3: #{bert_forward.1} parent=1 // loop_header
      %s17 = sphi 0, %s21
      %p18 = scmp.ge.s32.totalorder %s17, 4
      %s27 = sphi 0, %s29
      %s30 = sphi 0, %s27
      %s31 = sphi 0, %s30
      %s47 = sphi 0, %s31
      %s53 = sphi 0, %s55
      %s56 = sphi 0, %s53
      %s57 = sphi 0, %s56
      %s73 = sphi 0, %s57
      %s77 = sphi 0, %s77
      %s79 = sphi 0, %s77
      %s80 = sphi 0, %s79
      %s94 = sphi 0, %s80
      %s98 = sphi 0, %s98
      %s100 = sphi 0, %s98
      %s101 = sphi 0, %s100
      %s115 = sphi 0, %s101
      %s119 = sphi 0, %s119
      %s121 = sphi 0, %s119
      %s122 = sphi 0, %s121
      %s136 = sphi 0, %s122
      %s140 = sphi 0, %s140
      %s142 = sphi 0, %s140
      %s143 = sphi 0, %s142
      %s157 = sphi 0, %s143
      %s161 = sphi 0, %s161
      %s163 = sphi 0, %s161
      %s164 = sphi 0, %s163
      %s178 = sphi 0, %s164
      %s182 = sphi 0, %s182
      %s184 = sphi 0, %s182
      %s185 = sphi 0, %s184
      %s199 = sphi 0, %s185
      %s205 = sphi 0, %s207
      %s208 = sphi 0, %s205
      %s209 = sphi 0, %s208
      %s225 = sphi 0, %s209
    $region4: #{bert_forward.1} parent=1 // loop_header_branch
      %20 = sbr.rel (%p18) target = $region8
    $region5: #{bert_forward.1} parent=1 // loop_body
      %s22 = ssub.s32 %s17, 1
      %s23 = ssub.s32 %s17, 2
      %s24 = sadd.s32 %s17, 1
      %s25 = ssub.s32 %s17, %s24
      %p26 = scmp.eq.s32.totalorder %s25, 0
      %s28 = sadd.s32 %s27, 1
      %s29 = scalar_select %p26, %s27, %s28
      %p32 = pneg %p26
      %p33 = scmp.eq.s32.totalorder %s17, 1
      %p34 = por %p32, %p33
      %p35 = scmp.ne.s32.totalorder %s27, %s30
      %p36 = scmp.eq.s32.totalorder %s17, 0
      %p37 = por %p35, %p36
      %p38 = scmp.ne.s32.totalorder %s27, %s30
      %p39 = scmp.eq.s32.totalorder %s22, 1
      %p40 = por %p38, %p39
      %p41 = scmp.ne.s32.totalorder %s30, %s31
      %p42 = scmp.eq.s32.totalorder %s22, 0
      %p43 = por %p41, %p42
      %p44 = scmp.ne.s32.totalorder %s30, %s31
      %p45 = scmp.eq.s32.totalorder %s23, 1
      %p46 = por %p44, %p45
      %p48 = scmp.ne.s32.totalorder %s31, %s47
      %p49 = scmp.eq.s32.totalorder %s23, 0
      %p50 = por %p48, %p49
      %s51 = ssub.s32 %s17, %s24
      %p52 = scmp.eq.s32.totalorder %s51, 0
      %s54 = sadd.s32 %s53, 1
      %s55 = scalar_select %p52, %s53, %s54
      %p58 = pneg %p52
      %p59 = scmp.eq.s32.totalorder %s17, 1
      %p60 = por %p58, %p59
      %p61 = scmp.ne.s32.totalorder %s53, %s56
      %p62 = scmp.eq.s32.totalorder %s17, 0
      %p63 = por %p61, %p62
      %p64 = scmp.ne.s32.totalorder %s53, %s56
      %p65 = scmp.eq.s32.totalorder %s22, 1
      %p66 = por %p64, %p65
      %p67 = scmp.ne.s32.totalorder %s56, %s57
      %p68 = scmp.eq.s32.totalorder %s22, 0
      %p69 = por %p67, %p68
      %p70 = scmp.ne.s32.totalorder %s56, %s57
      %p71 = scmp.eq.s32.totalorder %s23, 1
      %p72 = por %p70, %p71
      %p74 = scmp.ne.s32.totalorder %s57, %s73
      %p75 = scmp.eq.s32.totalorder %s23, 0
      %p76 = por %p74, %p75
      %s78 = sadd.s32 %s77, 1
      %p81 = scmp.eq.s32.totalorder %s17, 1
      %p82 = scmp.ne.s32.totalorder %s77, %s79
      %p83 = scmp.eq.s32.totalorder %s17, 0
      %p84 = por %p82, %p83
      %p85 = scmp.ne.s32.totalorder %s77, %s79
      %p86 = scmp.eq.s32.totalorder %s22, 1
      %p87 = por %p85, %p86
      %p88 = scmp.ne.s32.totalorder %s79, %s80
      %p89 = scmp.eq.s32.totalorder %s22, 0
      %p90 = por %p88, %p89
      %p91 = scmp.ne.s32.totalorder %s79, %s80
      %p92 = scmp.eq.s32.totalorder %s23, 1
      %p93 = por %p91, %p92
      %p95 = scmp.ne.s32.totalorder %s80, %s94
      %p96 = scmp.eq.s32.totalorder %s23, 0
      %p97 = por %p95, %p96
      %s99 = sadd.s32 %s98, 1
      %p102 = scmp.eq.s32.totalorder %s17, 1
      %p103 = scmp.ne.s32.totalorder %s98, %s100
      %p104 = scmp.eq.s32.totalorder %s17, 0
      %p105 = por %p103, %p104
      %p106 = scmp.ne.s32.totalorder %s98, %s100
      %p107 = scmp.eq.s32.totalorder %s22, 1
      %p108 = por %p106, %p107
      %p109 = scmp.ne.s32.totalorder %s100, %s101
      %p110 = scmp.eq.s32.totalorder %s22, 0
      %p111 = por %p109, %p110
      %p112 = scmp.ne.s32.totalorder %s100, %s101
      %p113 = scmp.eq.s32.totalorder %s23, 1
      %p114 = por %p112, %p113
      %p116 = scmp.ne.s32.totalorder %s101, %s115
      %p117 = scmp.eq.s32.totalorder %s23, 0
      %p118 = por %p116, %p117
      %s120 = sadd.s32 %s119, 1
      %p123 = scmp.eq.s32.totalorder %s17, 1
      %p124 = scmp.ne.s32.totalorder %s119, %s121
      %p125 = scmp.eq.s32.totalorder %s17, 0
      %p126 = por %p124, %p125
      %p127 = scmp.ne.s32.totalorder %s119, %s121
      %p128 = scmp.eq.s32.totalorder %s22, 1
      %p129 = por %p127, %p128
      %p130 = scmp.ne.s32.totalorder %s121, %s122
      %p131 = scmp.eq.s32.totalorder %s22, 0
      %p132 = por %p130, %p131
      %p133 = scmp.ne.s32.totalorder %s121, %s122
      %p134 = scmp.eq.s32.totalorder %s23, 1
      %p135 = por %p133, %p134
      %p137 = scmp.ne.s32.totalorder %s122, %s136
      %p138 = scmp.eq.s32.totalorder %s23, 0
      %p139 = por %p137, %p138
      %s141 = sadd.s32 %s140, 1
      %p144 = scmp.eq.s32.totalorder %s17, 1
      %p145 = scmp.ne.s32.totalorder %s140, %s142
      %p146 = scmp.eq.s32.totalorder %s17, 0
      %p147 = por %p145, %p146
      %p148 = scmp.ne.s32.totalorder %s140, %s142
      %p149 = scmp.eq.s32.totalorder %s22, 1
      %p150 = por %p148, %p149
      %p151 = scmp.ne.s32.totalorder %s142, %s143
      %p152 = scmp.eq.s32.totalorder %s22, 0
      %p153 = por %p151, %p152
      %p154 = scmp.ne.s32.totalorder %s142, %s143
      %p155 = scmp.eq.s32.totalorder %s23, 1
      %p156 = por %p154, %p155
      %p158 = scmp.ne.s32.totalorder %s143, %s157
      %p159 = scmp.eq.s32.totalorder %s23, 0
      %p160 = por %p158, %p159
      %s162 = sadd.s32 %s161, 1
      %p165 = scmp.eq.s32.totalorder %s17, 1
      %p166 = scmp.ne.s32.totalorder %s161, %s163
      %p167 = scmp.eq.s32.totalorder %s17, 0
      %p168 = por %p166, %p167
      %p169 = scmp.ne.s32.totalorder %s161, %s163
      %p170 = scmp.eq.s32.totalorder %s22, 1
      %p171 = por %p169, %p170
      %p172 = scmp.ne.s32.totalorder %s163, %s164
      %p173 = scmp.eq.s32.totalorder %s22, 0
      %p174 = por %p172, %p173
      %p175 = scmp.ne.s32.totalorder %s163, %s164
      %p176 = scmp.eq.s32.totalorder %s23, 1
      %p177 = por %p175, %p176
      %p179 = scmp.ne.s32.totalorder %s164, %s178
      %p180 = scmp.eq.s32.totalorder %s23, 0
      %p181 = por %p179, %p180
      %s183 = sadd.s32 %s182, 1
      %p186 = scmp.eq.s32.totalorder %s17, 1
      %p187 = scmp.ne.s32.totalorder %s182, %s184
      %p188 = scmp.eq.s32.totalorder %s17, 0
      %p189 = por %p187, %p188
      %p190 = scmp.ne.s32.totalorder %s182, %s184
      %p191 = scmp.eq.s32.totalorder %s22, 1
      %p192 = por %p190, %p191
      %p193 = scmp.ne.s32.totalorder %s184, %s185
      %p194 = scmp.eq.s32.totalorder %s22, 0
      %p195 = por %p193, %p194
      %p196 = scmp.ne.s32.totalorder %s184, %s185
      %p197 = scmp.eq.s32.totalorder %s23, 1
      %p198 = por %p196, %p197
      %p200 = scmp.ne.s32.totalorder %s185, %s199
      %p201 = scmp.eq.s32.totalorder %s23, 0
      %p202 = por %p200, %p201
      %s203 = ssub.s32 %s17, %s24
      %p204 = scmp.eq.s32.totalorder %s203, 0
      %s206 = sadd.s32 %s205, 1
      %s207 = scalar_select %p204, %s205, %s206
      %p210 = pneg %p204
      %p211 = scmp.eq.s32.totalorder %s17, 1
      %p212 = por %p210, %p211
      %p213 = scmp.ne.s32.totalorder %s205, %s208
      %p214 = scmp.eq.s32.totalorder %s17, 0
      %p215 = por %p213, %p214
      %p216 = scmp.ne.s32.totalorder %s205, %s208
      %p217 = scmp.eq.s32.totalorder %s22, 1
      %p218 = por %p216, %p217
      %p219 = scmp.ne.s32.totalorder %s208, %s209
      %p220 = scmp.eq.s32.totalorder %s22, 0
      %p221 = por %p219, %p220
      %p222 = scmp.ne.s32.totalorder %s208, %s209
      %p223 = scmp.eq.s32.totalorder %s23, 1
      %p224 = por %p222, %p223
      %p226 = scmp.ne.s32.totalorder %s209, %s225
      %p227 = scmp.eq.s32.totalorder %s23, 0
      %p228 = por %p226, %p227
      %p229 = scmp.le.s32.totalorder 1, %s17
      %p230 = scmp.lt.s32.totalorder %s17, 3
      %p231 = pnand %p229, %p230
      %p232 = pneg %p231
      // Predicated region
      $region9: #{bert_forward.1} parent=5 // pred_check
        _
      $region10: #{bert_forward.1} parent=5 // pred_check_branch
        %234 = sbr.rel (%p231) target = $region12
      $region11: #{bert_forward.1} parent=5 // pred_region
        %s235 = ssub.s32 %s17, 1
        // Predicated region
        $region13: #{bert_forward.1} parent=11 // pred_check
          %p236 = pneg %p90
        $region14: #{bert_forward.1} parent=11 // pred_check_branch
          %238 = sbr.rel (%p236) target = $region16
        $region15: #{bert_forward.1} parent=11 // pred_region
          _
        $region16: #{bert_forward.1} parent=11 // pred_fallthru
          _
        // Predicated region
        $region17: #{bert_forward.1} parent=11 // pred_check
          %p239 = pneg %p111
        $region18: #{bert_forward.1} parent=11 // pred_check_branch
          %241 = sbr.rel (%p239) target = $region20
        $region19: #{bert_forward.1} parent=11 // pred_region
          _
        $region20: #{bert_forward.1} parent=11 // pred_fallthru
          _
        // Predicated region
        $region21: #{bert_forward.1} parent=11 // pred_check
          %p242 = pneg %p132
        $region22: #{bert_forward.1} parent=11 // pred_check_branch
          %244 = sbr.rel (%p242) target = $region24
        $region23: #{bert_forward.1} parent=11 // pred_region
          _
        $region24: #{bert_forward.1} parent=11 // pred_fallthru
          _
        // Predicated region
        $region25: #{bert_forward.1} parent=11 // pred_check
          %p245 = pneg %p153
        $region26: #{bert_forward.1} parent=11 // pred_check_branch
          %247 = sbr.rel (%p245) target = $region28
        $region27: #{bert_forward.1} parent=11 // pred_region
          _
        $region28: #{bert_forward.1} parent=11 // pred_fallthru
          _
        // Predicated region
        $region29: #{bert_forward.1} parent=11 // pred_check
          %p248 = pneg %p174
        $region30: #{bert_forward.1} parent=11 // pred_check_branch
          %250 = sbr.rel (%p248) target = $region32
        $region31: #{bert_forward.1} parent=11 // pred_region
          _
        $region32: #{bert_forward.1} parent=11 // pred_fallthru
          _
        // Predicated region
        $region33: #{bert_forward.1} parent=11 // pred_check
          %p251 = pneg %p195
        $region34: #{bert_forward.1} parent=11 // pred_check_branch
          %253 = sbr.rel (%p251) target = $region36
        $region35: #{bert_forward.1} parent=11 // pred_region
          _
        $region36: #{bert_forward.1} parent=11 // pred_fallthru
          _
      $region12: #{bert_forward.1} parent=5 // pred_fallthru
        _
      %p254 = scmp.lt.s32.totalorder %s17, 2
      // Predicated region
      $region37: #{bert_forward.1} parent=5 // pred_check
        %p255 = pneg %p254
      $region38: #{bert_forward.1} parent=5 // pred_check_branch
        %257 = sbr.rel (%p255) target = $region40
      $region39: #{bert_forward.1} parent=5 // pred_region
        // Predicated region
        $region41: #{bert_forward.1} parent=39 // pred_check
          %p258 = pneg %p37
        $region42: #{bert_forward.1} parent=39 // pred_check_branch
          %260 = sbr.rel (%p258) target = $region44
        $region43: #{bert_forward.1} parent=39 // pred_region
          %p261 = scmp.lt.s32.totalorder %s17, 1
          %s262 = scalar_select %p261, %s17, 1
          %s263 = smul.addr %s262, 8
          %s264 = scalar_lea.vmem %s0, %s263
        $region44: #{bert_forward.1} parent=39 // pred_fallthru
          _
        // Predicated region
        $region45: #{bert_forward.1} parent=39 // pred_check
          %p265 = pneg %p63
        $region46: #{bert_forward.1} parent=39 // pred_check_branch
          %267 = sbr.rel (%p265) target = $region48
        $region47: #{bert_forward.1} parent=39 // pred_region
          %p268 = scmp.lt.s32.totalorder %s17, 1
          %s269 = scalar_select %p268, %s17, 1
          %s270 = scalar_lea.vmem %s1, %s269
        $region48: #{bert_forward.1} parent=39 // pred_fallthru
          _
      $region40: #{bert_forward.1} parent=5 // pred_fallthru
        _
      %p271 = scmp.le.s32.totalorder 1, %s17
      %p272 = scmp.lt.s32.totalorder %s17, 3
      %p273 = pnand %p271, %p272
      %p274 = pneg %p273
      // Predicated region
      $region49: #{bert_forward.1} parent=5 // pred_check
        _
      $region50: #{bert_forward.1} parent=5 // pred_check_branch
        %276 = sbr.rel (%p273) target = $region52
      $region51: #{bert_forward.1} parent=5 // pred_region
        %s277 = ssub.s32 %s17, 1
        %p278 = scmp.lt.s32.totalorder %s22, 1
        %s279 = scalar_select %p278, %s22, 1
        %s280 = smul.addr %s279, 8
        %s281 = scalar_lea.vmem %s0, %s280
        %p282 = pneg %p43
        %p283 = pneg %p40
        %p284 = scmp.lt.s32.totalorder %s22, 1
        %s285 = scalar_select %p284, %s22, 1
        %s286 = scalar_lea.vmem %s1, %s285
        %p287 = pneg %p69
        %p288 = pneg %p66
        %p289 = pneg %p90
        %p290 = pneg %p87
        %p291 = pneg %p111
        %p292 = pneg %p108
        %p293 = pneg %p132
        %p294 = pneg %p129
        %p295 = pneg %p153
        %p296 = pneg %p150
        %p297 = pneg %p174
        %p298 = pneg %p171
        %p299 = pneg %p195
        %p300 = pneg %p192
        %p301 = pneg %p221
        %p302 = pneg %p218
        %s303 = sand.u32 %s208, 1
        %s304 = scalar_lea.sflag [#allocation3], %s303
        %s305 = sand.u32 %s208, 1
        %s306 = smul.addr %s305, 8
        %s307 = scalar_lea.vmem [#allocation2], %s306
        %p308 = scmp.lt.s32.totalorder %s22, 1
        %s309 = scalar_select %p308, %s22, 1
        %s310 = smul.addr %s309, 8
        %s311 = scalar_lea.vmem %s0, %s310
        %p312 = scmp.lt.s32.totalorder %s22, 1
        %s313 = scalar_select %p312, %s22, 1
        %s314 = scalar_lea.vmem %s1, %s313
        %v315 = vld [vmem:[%s7] sm:$0xff]
        %v316 = vld [vmem:[%s311] sm:$0xff]
        %vm317 = vcmask 261120
        %v318 = vsel %vm317, %v316, 0.0
        %319 = vadd.xlane.f32.xlu0 %v318
        %v320 = vpop.xlane.xlu0 %319
        %v321 = vrcp.pop 32.0
        %v322 = vmul.f32 32.0, %v321
        %v323 = vsub.f32 1.0, %v322
        %v324 = vmul.f32 %v321, %v323
        %v325 = vadd.f32 %v321, %v324
        %vm326 = vweird.f32 %v321
        %v327 = vsel %vm326, %v321, %v325
        %v328 = vmul.f32 %v320, %v327
        %v329 = vsub.f32 %v316, %v328
        %v330 = vmul.f32 %v329, %v329
        %v331 = vsel %vm317, %v330, 0.0
        %332 = vadd.xlane.f32.xlu0 %v331
        %v333 = vpop.xlane.xlu0 %332
        %v334 = vmul.f32 %v333, %v327
        %v335 = vadd.f32 %v334, 1e-12
        %v336 = vrsqrt.pop %v335
        %v337 = vmul.f32 %v336, %v335
        %v338 = vmul.f32 %v337, %v336
        %v339 = vmul.f32 0.5, %v338
        %v340 = vsub.f32 1.5, %v339
        %v341 = vmul.f32 %v336, %v340
        %vm342 = vweird.f32 %v335
        %vm343 = vweird.f32 %v336
        %vm344 = vmor %vm342, %vm343
        %v345 = vsel %vm344, %v336, %v341
        %v346 = vmul.f32 %v329, %v345
        %v347 = vperm.slane %v315, 0
        %v348 = vmul.f32 %v346, %v347
        %v349 = vperm.slane %v315, 1
        %v350 = vadd.f32 %v348, %v349
        %v351 = vld [vmem:[%s314] sm:$0x1]
        %s352 = scalar_lea.vmem %s7, 8
        %v353 = vld [vmem:[%s352] sm:$0xff]
        %v354 = vld [vmem:[%s2] sm:$0xff]
        %v355 = vld [vmem:[%s2 + $0x8] sm:$0xff]
        %v356 = vld [vmem:[%s2 + $0x10] sm:$0xff]
        %v357 = vld [vmem:[%s2 + $0x18] sm:$0xff]
        %v358 = vld [vmem:[%s2 + $0x20] sm:$0xff]
        %v359 = vld [vmem:[%s2 + $0x28] sm:$0xff]
        %v360 = vld [vmem:[%s2 + $0x30] sm:$0xff]
        %v361 = vld [vmem:[%s2 + $0x38] sm:$0xff]
        %v362 = vld [vmem:[%s2 + $0x40] sm:$0xff]
        %v363 = vld [vmem:[%s2 + $0x48] sm:$0xff]
        %v364 = vld [vmem:[%s2 + $0x50] sm:$0xff]
        %v365 = vld [vmem:[%s2 + $0x58] sm:$0xff]
        %v366 = vld [vmem:[%s2 + $0x60] sm:$0xff]
        %v367 = vld [vmem:[%s2 + $0x68] sm:$0xff]
        %v368 = vld [vmem:[%s2 + $0x70] sm:$0xff]
        %v369 = vld [vmem:[%s2 + $0x78] sm:$0xff]
        %v370 = vld [vmem:[%s2 + $0x80] sm:$0xff]
        %v371 = vld [vmem:[%s2 + $0x88] sm:$0xff]
        %v372 = vld [vmem:[%s2 + $0x90] sm:$0xff]
        %v373 = vld [vmem:[%s2 + $0x98] sm:$0xff]
        %v374 = vld [vmem:[%s2 + $0xa0] sm:$0xff]
        %v375 = vld [vmem:[%s2 + $0xa8] sm:$0xff]
        %v376 = vld [vmem:[%s2 + $0xb0] sm:$0xff]
        %v377 = vld [vmem:[%s2 + $0xb8] sm:$0xff]
        %v378 = vld [vmem:[%s2 + $0xc0] sm:$0xff]
        %v379 = vld [vmem:[%s2 + $0xc8] sm:$0xff]
        %v380 = vld [vmem:[%s2 + $0xd0] sm:$0xff]
        %v381 = vld [vmem:[%s2 + $0xd8] sm:$0xff]
        %v382 = vld [vmem:[%s2 + $0xe0] sm:$0xff]
        %v383 = vld [vmem:[%s2 + $0xe8] sm:$0xff]
        %v384 = vld [vmem:[%s2 + $0xf0] sm:$0xff]
        %v385 = vld [vmem:[%s2 + $0xf8] sm:$0xff]
        %v386 = vld [vmem:[%s2 + $0x100] sm:$0xff]
        %v387 = vld [vmem:[%s2 + $0x108] sm:$0xff]
        %v388 = vld [vmem:[%s2 + $0x110] sm:$0xff]
        %v389 = vld [vmem:[%s2 + $0x118] sm:$0xff]
        %v390 = vld [vmem:[%s2 + $0x120] sm:$0xff]
        %v391 = vld [vmem:[%s2 + $0x128] sm:$0xff]
        %v392 = vld [vmem:[%s2 + $0x130] sm:$0xff]
        %v393 = vld [vmem:[%s2 + $0x138] sm:$0xff]
        %v394 = vld [vmem:[%s2 + $0x140] sm:$0xff]
        %v395 = vld [vmem:[%s2 + $0x148] sm:$0xff]
        %v396 = vld [vmem:[%s2 + $0x150] sm:$0xff]
        %v397 = vld [vmem:[%s2 + $0x158] sm:$0xff]
        %v398 = vld [vmem:[%s2 + $0x160] sm:$0xff]
        %v399 = vld [vmem:[%s2 + $0x168] sm:$0xff]
        %v400 = vld [vmem:[%s2 + $0x170] sm:$0xff]
        %v401 = vld [vmem:[%s2 + $0x178] sm:$0xff]
        %v402 = vld [vmem:[%s3] sm:$0xff]
        %v403 = vld [vmem:[%s3 + $0x8] sm:$0xff]
        %v404 = vld [vmem:[%s3 + $0x10] sm:$0xff]
        %v405 = vld [vmem:[%s3 + $0x18] sm:$0xff]
        %v406 = vld [vmem:[%s3 + $0x20] sm:$0xff]
        %v407 = vld [vmem:[%s3 + $0x28] sm:$0xff]
        %v408 = vld [vmem:[%s3 + $0x30] sm:$0xff]
        %v409 = vld [vmem:[%s3 + $0x38] sm:$0xff]
        %v410 = vld [vmem:[%s3 + $0x40] sm:$0xff]
        %v411 = vld [vmem:[%s3 + $0x48] sm:$0xff]
        %v412 = vld [vmem:[%s3 + $0x50] sm:$0xff]
        %v413 = vld [vmem:[%s3 + $0x58] sm:$0xff]
        %v415 = vsel %vm317, %v350, 0
        %417 = vmatpush.msra.mxu0 0.0
        %418 = vmatpush.msra.mxu0 0.0
        %419 = vmatpush.msra.mxu0 0.0
        %420 = vmatpush.msra.mxu0 0.0
        %421 = vmatpush.msra.mxu0 0.0
        %422 = vmatpush.msra.mxu0 0.0
        %423 = vmatpush.msra.mxu0 0.0
        %424 = vmatpush.msra.mxu0 0.0
        %425 = vmatpush.msra.mxu0 0.0
        %426 = vmatpush.msra.mxu0 0.0
        %427 = vmatpush.msra.mxu0 0.0
        %428 = vmatpush.msra.mxu0 0.0
        %429 = vmatpush.msra.mxu0 %v357
        %430 = vmatpush.msra.mxu0 %v356
        %431 = vmatpush.msra.mxu0 %v355
        %432 = vmatpush.msra.mxu0 %v354
        %433 = vmatmul.f32.gmra.mxu0 %v415
        %v434 = vpop.f32.mrf.mxu0
        %v435 = vadd.f32 %v402, %v434
        %436 = vdwg.mxu0
        %437 = vmatpush.msra.mxu0 0.0
        %438 = vmatpush.msra.mxu0 0.0
        %439 = vmatpush.msra.mxu0 0.0
        %440 = vmatpush.msra.mxu0 0.0
        %441 = vmatpush.msra.mxu0 0.0
        %442 = vmatpush.msra.mxu0 0.0
        %443 = vmatpush.msra.mxu0 0.0
        %444 = vmatpush.msra.mxu0 0.0
        %445 = vmatpush.msra.mxu0 0.0
        %446 = vmatpush.msra.mxu0 0.0
        %447 = vmatpush.msra.mxu0 0.0
        %448 = vmatpush.msra.mxu0 0.0
        %449 = vmatpush.msra.mxu0 %v361
        %450 = vmatpush.msra.mxu0 %v360
        %451 = vmatpush.msra.mxu0 %v359
        %452 = vmatpush.msra.mxu0 %v358
        %453 = vmatmul.f32.gmra.mxu0 %v415
        %v454 = vpop.f32.mrf.mxu0
        %v455 = vadd.f32 %v403, %v454
        %456 = vdwg.mxu0
        %457 = vmatpush.msra.mxu0 0.0
        %458 = vmatpush.msra.mxu0 0.0
        %459 = vmatpush.msra.mxu0 0.0
        %460 = vmatpush.msra.mxu0 0.0
        %461 = vmatpush.msra.mxu0 0.0
        %462 = vmatpush.msra.mxu0 0.0
        %463 = vmatpush.msra.mxu0 0.0
        %464 = vmatpush.msra.mxu0 0.0
        %465 = vmatpush.msra.mxu0 0.0
        %466 = vmatpush.msra.mxu0 0.0
        %467 = vmatpush.msra.mxu0 0.0
        %468 = vmatpush.msra.mxu0 0.0
        %469 = vmatpush.msra.mxu0 %v365
        %470 = vmatpush.msra.mxu0 %v364
        %471 = vmatpush.msra.mxu0 %v363
        %472 = vmatpush.msra.mxu0 %v362
        %473 = vmatmul.f32.gmra.mxu0 %v415
        %v474 = vpop.f32.mrf.mxu0
        %v475 = vadd.f32 %v404, %v474
        %476 = vdwg.mxu0
        %477 = vmatpush.msra.mxu0 0.0
        %478 = vmatpush.msra.mxu0 0.0
        %479 = vmatpush.msra.mxu0 0.0
        %480 = vmatpush.msra.mxu0 0.0
        %481 = vmatpush.msra.mxu0 0.0
        %482 = vmatpush.msra.mxu0 0.0
        %483 = vmatpush.msra.mxu0 0.0
        %484 = vmatpush.msra.mxu0 0.0
        %485 = vmatpush.msra.mxu0 0.0
        %486 = vmatpush.msra.mxu0 0.0
        %487 = vmatpush.msra.mxu0 0.0
        %488 = vmatpush.msra.mxu0 0.0
        %489 = vmatpush.msra.mxu0 %v369
        %490 = vmatpush.msra.mxu0 %v368
        %491 = vmatpush.msra.mxu0 %v367
        %492 = vmatpush.msra.mxu0 %v366
        %493 = vmatmul.f32.gmra.mxu0 %v415
        %v494 = vpop.f32.mrf.mxu0
        %v495 = vadd.f32 %v405, %v494
        %496 = vdwg.mxu0
        %497 = vmatpush.msra.mxu0 0.0
        %498 = vmatpush.msra.mxu0 0.0
        %499 = vmatpush.msra.mxu0 0.0
        %500 = vmatpush.msra.mxu0 0.0
        %501 = vmatpush.msra.mxu0 0.0
        %502 = vmatpush.msra.mxu0 0.0
        %503 = vmatpush.msra.mxu0 0.0
        %504 = vmatpush.msra.mxu0 0.0
        %505 = vmatpush.msra.mxu0 0.0
        %506 = vmatpush.msra.mxu0 0.0
        %507 = vmatpush.msra.mxu0 0.0
        %508 = vmatpush.msra.mxu0 0.0
        %509 = vmatpush.msra.mxu0 %v373
        %510 = vmatpush.msra.mxu0 %v372
        %511 = vmatpush.msra.mxu0 %v371
        %512 = vmatpush.msra.mxu0 %v370
        %513 = vmatmul.f32.gmra.mxu0 %v415
        %v514 = vpop.f32.mrf.mxu0
        %v515 = vadd.f32 %v406, %v514
        %516 = vdwg.mxu0
        %517 = vmatpush.msra.mxu0 0.0
        %518 = vmatpush.msra.mxu0 0.0
        %519 = vmatpush.msra.mxu0 0.0
        %520 = vmatpush.msra.mxu0 0.0
        %521 = vmatpush.msra.mxu0 0.0
        %522 = vmatpush.msra.mxu0 0.0
        %523 = vmatpush.msra.mxu0 0.0
        %524 = vmatpush.msra.mxu0 0.0
        %525 = vmatpush.msra.mxu0 0.0
        %526 = vmatpush.msra.mxu0 0.0
        %527 = vmatpush.msra.mxu0 0.0
        %528 = vmatpush.msra.mxu0 0.0
        %529 = vmatpush.msra.mxu0 %v377
        %530 = vmatpush.msra.mxu0 %v376
        %531 = vmatpush.msra.mxu0 %v375
        %532 = vmatpush.msra.mxu0 %v374
        %533 = vmatmul.f32.gmra.mxu0 %v415
        %v534 = vpop.f32.mrf.mxu0
        %v535 = vadd.f32 %v407, %v534
        %536 = vdwg.mxu0
        %537 = vmatpush.msra.mxu0 0.0
        %538 = vmatpush.msra.mxu0 0.0
        %539 = vmatpush.msra.mxu0 0.0
        %540 = vmatpush.msra.mxu0 0.0
        %541 = vmatpush.msra.mxu0 0.0
        %542 = vmatpush.msra.mxu0 0.0
        %543 = vmatpush.msra.mxu0 0.0
        %544 = vmatpush.msra.mxu0 0.0
        %545 = vmatpush.msra.mxu0 0.0
        %546 = vmatpush.msra.mxu0 0.0
        %547 = vmatpush.msra.mxu0 0.0
        %548 = vmatpush.msra.mxu0 0.0
        %549 = vmatpush.msra.mxu0 %v381
        %550 = vmatpush.msra.mxu0 %v380
        %551 = vmatpush.msra.mxu0 %v379
        %552 = vmatpush.msra.mxu0 %v378
        %553 = vmatmul.f32.gmra.mxu0 %v415
        %v554 = vpop.f32.mrf.mxu0
        %v555 = vadd.f32 %v408, %v554
        %556 = vdwg.mxu0
        %557 = vmatpush.msra.mxu0 0.0
        %558 = vmatpush.msra.mxu0 0.0
        %559 = vmatpush.msra.mxu0 0.0
        %560 = vmatpush.msra.mxu0 0.0
        %561 = vmatpush.msra.mxu0 0.0
        %562 = vmatpush.msra.mxu0 0.0
        %563 = vmatpush.msra.mxu0 0.0
        %564 = vmatpush.msra.mxu0 0.0
        %565 = vmatpush.msra.mxu0 0.0
        %566 = vmatpush.msra.mxu0 0.0
        %567 = vmatpush.msra.mxu0 0.0
        %568 = vmatpush.msra.mxu0 0.0
        %569 = vmatpush.msra.mxu0 %v385
        %570 = vmatpush.msra.mxu0 %v384
        %571 = vmatpush.msra.mxu0 %v383
        %572 = vmatpush.msra.mxu0 %v382
        %573 = vmatmul.f32.gmra.mxu0 %v415
        %v574 = vpop.f32.mrf.mxu0
        %v575 = vadd.f32 %v409, %v574
        %576 = vdwg.mxu0
        %577 = vmatpush.msra.mxu0 0.0
        %578 = vmatpush.msra.mxu0 0.0
        %579 = vmatpush.msra.mxu0 0.0
        %580 = vmatpush.msra.mxu0 0.0
        %581 = vmatpush.msra.mxu0 0.0
        %582 = vmatpush.msra.mxu0 0.0
        %583 = vmatpush.msra.mxu0 0.0
        %584 = vmatpush.msra.mxu0 0.0
        %585 = vmatpush.msra.mxu0 0.0
        %586 = vmatpush.msra.mxu0 0.0
        %587 = vmatpush.msra.mxu0 0.0
        %588 = vmatpush.msra.mxu0 0.0
        %589 = vmatpush.msra.mxu0 %v389
        %590 = vmatpush.msra.mxu0 %v388
        %591 = vmatpush.msra.mxu0 %v387
        %592 = vmatpush.msra.mxu0 %v386
        %593 = vmatmul.f32.gmra.mxu0 %v415
        %v594 = vpop.f32.mrf.mxu0
        %v595 = vadd.f32 %v410, %v594
        %596 = vdwg.mxu0
        %597 = vmatpush.msra.mxu0 0.0
        %598 = vmatpush.msra.mxu0 0.0
        %599 = vmatpush.msra.mxu0 0.0
        %600 = vmatpush.msra.mxu0 0.0
        %601 = vmatpush.msra.mxu0 0.0
        %602 = vmatpush.msra.mxu0 0.0
        %603 = vmatpush.msra.mxu0 0.0
        %604 = vmatpush.msra.mxu0 0.0
        %605 = vmatpush.msra.mxu0 0.0
        %606 = vmatpush.msra.mxu0 0.0
        %607 = vmatpush.msra.mxu0 0.0
        %608 = vmatpush.msra.mxu0 0.0
        %609 = vmatpush.msra.mxu0 %v393
        %610 = vmatpush.msra.mxu0 %v392
        %611 = vmatpush.msra.mxu0 %v391
        %612 = vmatpush.msra.mxu0 %v390
        %613 = vmatmul.f32.gmra.mxu0 %v415
        %v614 = vpop.f32.mrf.mxu0
        %v615 = vadd.f32 %v411, %v614
        %616 = vdwg.mxu0
        %617 = vmatpush.msra.mxu0 0.0
        %618 = vmatpush.msra.mxu0 0.0
        %619 = vmatpush.msra.mxu0 0.0
        %620 = vmatpush.msra.mxu0 0.0
        %621 = vmatpush.msra.mxu0 0.0
        %622 = vmatpush.msra.mxu0 0.0
        %623 = vmatpush.msra.mxu0 0.0
        %624 = vmatpush.msra.mxu0 0.0
        %625 = vmatpush.msra.mxu0 0.0
        %626 = vmatpush.msra.mxu0 0.0
        %627 = vmatpush.msra.mxu0 0.0
        %628 = vmatpush.msra.mxu0 0.0
        %629 = vmatpush.msra.mxu0 %v397
        %630 = vmatpush.msra.mxu0 %v396
        %631 = vmatpush.msra.mxu0 %v395
        %632 = vmatpush.msra.mxu0 %v394
        %633 = vmatmul.f32.gmra.mxu0 %v415
        %v634 = vpop.f32.mrf.mxu0
        %v635 = vadd.f32 %v412, %v634
        %636 = vdwg.mxu0
        %637 = vmatpush.msra.mxu0 0.0
        %638 = vmatpush.msra.mxu0 0.0
        %639 = vmatpush.msra.mxu0 0.0
        %640 = vmatpush.msra.mxu0 0.0
        %641 = vmatpush.msra.mxu0 0.0
        %642 = vmatpush.msra.mxu0 0.0
        %643 = vmatpush.msra.mxu0 0.0
        %644 = vmatpush.msra.mxu0 0.0
        %645 = vmatpush.msra.mxu0 0.0
        %646 = vmatpush.msra.mxu0 0.0
        %647 = vmatpush.msra.mxu0 0.0
        %648 = vmatpush.msra.mxu0 0.0
        %649 = vmatpush.msra.mxu0 %v401
        %650 = vmatpush.msra.mxu0 %v400
        %651 = vmatpush.msra.mxu0 %v399
        %652 = vmatpush.msra.mxu0 %v398
        %653 = vmatmul.f32.gmra.mxu0 %v415
        %v654 = vpop.f32.mrf.mxu0
        %v655 = vadd.f32 %v413, %v654
        %656 = vdwg.mxu0
        %vm657 = vcmask 64512
        %v659 = vsel %vm657, %v435, 0
        %v662 = vsel %vm657, %v515, 0
        %664 = vmatpush.xpose.msra.mxu0 0.0
        %665 = vmatpush.xpose.msra.mxu0 0.0
        %666 = vmatpush.xpose.msra.mxu0 0.0
        %667 = vmatpush.xpose.msra.mxu0 0.0
        %668 = vmatpush.xpose.msra.mxu0 0.0
        %669 = vmatpush.xpose.msra.mxu0 0.0
        %670 = vmatpush.xpose.msra.mxu0 0.0
        %671 = vmatpush.xpose.msra.mxu0 0.0
        %672 = vmatpush.xpose.msra.mxu0 0.0
        %673 = vmatpush.xpose.msra.mxu0 0.0
        %674 = vmatpush.xpose.msra.mxu0 0.0
        %675 = vmatpush.xpose.msra.mxu0 0.0
        %676 = vmatpush.xpose.msra.mxu0 0.0
        %677 = vmatpush.xpose.msra.mxu0 0.0
        %678 = vmatpush.xpose.msra.mxu0 0.0
        %679 = vmatpush.xpose.msra.mxu0 %v662
        %680 = vmatmul.f32.gmra.mxu0 %v659
        %v681 = vpop.f32.mrf.mxu0
        %v682 = vadd.f32 0.0, %v681
        %683 = vdwg.mxu0
        %v685 = vsel %vm657, %v455, 0
        %v688 = vsel %vm657, %v535, 0
        %690 = vmatpush.xpose.msra.mxu0 0.0
        %691 = vmatpush.xpose.msra.mxu0 0.0
        %692 = vmatpush.xpose.msra.mxu0 0.0
        %693 = vmatpush.xpose.msra.mxu0 0.0
        %694 = vmatpush.xpose.msra.mxu0 0.0
        %695 = vmatpush.xpose.msra.mxu0 0.0
        %696 = vmatpush.xpose.msra.mxu0 0.0
        %697 = vmatpush.xpose.msra.mxu0 0.0
        %698 = vmatpush.xpose.msra.mxu0 0.0
        %699 = vmatpush.xpose.msra.mxu0 0.0
        %700 = vmatpush.xpose.msra.mxu0 0.0
        %701 = vmatpush.xpose.msra.mxu0 0.0
        %702 = vmatpush.xpose.msra.mxu0 0.0
        %703 = vmatpush.xpose.msra.mxu0 0.0
        %704 = vmatpush.xpose.msra.mxu0 0.0
        %705 = vmatpush.xpose.msra.mxu0 %v688
        %706 = vmatmul.f32.gmra.mxu0 %v685
        %v707 = vpop.f32.mrf.mxu0
        %v708 = vadd.f32 0.0, %v707
        %709 = vdwg.mxu0
        %v711 = vsel %vm657, %v475, 0
        %v714 = vsel %vm657, %v555, 0
        %716 = vmatpush.xpose.msra.mxu0 0.0
        %717 = vmatpush.xpose.msra.mxu0 0.0
        %718 = vmatpush.xpose.msra.mxu0 0.0
        %719 = vmatpush.xpose.msra.mxu0 0.0
        %720 = vmatpush.xpose.msra.mxu0 0.0
        %721 = vmatpush.xpose.msra.mxu0 0.0
        %722 = vmatpush.xpose.msra.mxu0 0.0
        %723 = vmatpush.xpose.msra.mxu0 0.0
        %724 = vmatpush.xpose.msra.mxu0 0.0
        %725 = vmatpush.xpose.msra.mxu0 0.0
        %726 = vmatpush.xpose.msra.mxu0 0.0
        %727 = vmatpush.xpose.msra.mxu0 0.0
        %728 = vmatpush.xpose.msra.mxu0 0.0
        %729 = vmatpush.xpose.msra.mxu0 0.0
        %730 = vmatpush.xpose.msra.mxu0 0.0
        %731 = vmatpush.xpose.msra.mxu0 %v714
        %732 = vmatmul.f32.gmra.mxu0 %v711
        %v733 = vpop.f32.mrf.mxu0
        %v734 = vadd.f32 0.0, %v733
        %735 = vdwg.mxu0
        %v737 = vsel %vm657, %v495, 0
        %v740 = vsel %vm657, %v575, 0
        %742 = vmatpush.xpose.msra.mxu0 0.0
        %743 = vmatpush.xpose.msra.mxu0 0.0
        %744 = vmatpush.xpose.msra.mxu0 0.0
        %745 = vmatpush.xpose.msra.mxu0 0.0
        %746 = vmatpush.xpose.msra.mxu0 0.0
        %747 = vmatpush.xpose.msra.mxu0 0.0
        %748 = vmatpush.xpose.msra.mxu0 0.0
        %749 = vmatpush.xpose.msra.mxu0 0.0
        %750 = vmatpush.xpose.msra.mxu0 0.0
        %751 = vmatpush.xpose.msra.mxu0 0.0
        %752 = vmatpush.xpose.msra.mxu0 0.0
        %753 = vmatpush.xpose.msra.mxu0 0.0
        %754 = vmatpush.xpose.msra.mxu0 0.0
        %755 = vmatpush.xpose.msra.mxu0 0.0
        %756 = vmatpush.xpose.msra.mxu0 0.0
        %757 = vmatpush.xpose.msra.mxu0 %v740
        %758 = vmatmul.f32.gmra.mxu0 %v737
        %v759 = vpop.f32.mrf.mxu0
        %v760 = vadd.f32 0.0, %v759
        %761 = vdwg.mxu0
        %v762 = vmul.f32 %v682, 0.35355338
        %v763 = vmul.f32 %v708, 0.35355338
        %v764 = vmul.f32 %v734, 0.35355338
        %v765 = vmul.f32 %v760, 0.35355338
        %v767 = vperm.slane %v351, 0
        %v769 = vadd.f32 %v762, %v767
        %v770 = vadd.f32 %v763, %v767
        %v771 = vadd.f32 %v764, %v767
        %v772 = vadd.f32 %v765, %v767
        %v773 = vsel %vm657, %v769, -inf
        %774 = vmax.xlane.f32.xlu0 %v773
        %v775 = vpop.xlane.xlu0 %774
        %v776 = vsel %vm657, %v770, -inf
        %777 = vmax.xlane.f32.xlu0 %v776
        %v778 = vpop.xlane.xlu0 %777
        %v779 = vsel %vm657, %v771, -inf
        %780 = vmax.xlane.f32.xlu0 %v779
        %v781 = vpop.xlane.xlu0 %780
        %v782 = vsel %vm657, %v772, -inf
        %783 = vmax.xlane.f32.xlu0 %v782
        %v784 = vpop.xlane.xlu0 %783
        %v785 = vsub.f32 %v769, %v775
        %v786 = vsub.f32 %v770, %v778
        %v787 = vsub.f32 %v771, %v781
        %v788 = vsub.f32 %v772, %v784
        %v789 = vmul.f32 %v785, 1.442695
        %v790 = vpow.pop %v789
        %v791 = vmul.f32 %v786, 1.442695
        %v792 = vpow.pop %v791
        %v793 = vmul.f32 %v787, 1.442695
        %v794 = vpow.pop %v793
        %v795 = vmul.f32 %v788, 1.442695
        %v796 = vpow.pop %v795
        %v797 = vsel %vm657, %v790, 0.0
        %798 = vadd.xlane.f32.xlu0 %v797
        %v799 = vpop.xlane.xlu0 %798
        %v800 = vsel %vm657, %v792, 0.0
        %801 = vadd.xlane.f32.xlu0 %v800
        %v802 = vpop.xlane.xlu0 %801
        %v803 = vsel %vm657, %v794, 0.0
        %804 = vadd.xlane.f32.xlu0 %v803
        %v805 = vpop.xlane.xlu0 %804
        %v806 = vsel %vm657, %v796, 0.0
        %807 = vadd.xlane.f32.xlu0 %v806
        %v808 = vpop.xlane.xlu0 %807
        %v809 = vrcp.pop %v799
        %v810 = vmul.f32 %v799, %v809
        %v811 = vsub.f32 1.0, %v810
        %v812 = vmul.f32 %v809, %v811
        %v813 = vadd.f32 %v809, %v812
        %vm814 = vweird.f32 %v799
        %vm815 = vweird.f32 %v809
        %vm816 = vmor %vm814, %vm815
        %v817 = vsel %vm816, %v809, %v813
        %v818 = vand.u32 2147483647, %v799
        %vm819 = vcmp.eq.f32.partialorder %v818, 8.507059e+37
        %v820 = vand.u32 %v799, 2147483648
        %v821 = vor.u32 1.1754944e-38, %v820
        %v822 = vsel %vm819, %v821, %v817
        %v823 = vmul.f32 %v790, %v822
        %v824 = vrcp.pop %v802
        %v825 = vmul.f32 %v802, %v824
        %v826 = vsub.f32 1.0, %v825
        %v827 = vmul.f32 %v824, %v826
        %v828 = vadd.f32 %v824, %v827
        %vm829 = vweird.f32 %v802
        %vm830 = vweird.f32 %v824
        %vm831 = vmor %vm829, %vm830
        %v832 = vsel %vm831, %v824, %v828
        %v833 = vand.u32 2147483647, %v802
        %vm834 = vcmp.eq.f32.partialorder %v833, 8.507059e+37
        %v835 = vand.u32 %v802, 2147483648
        %v836 = vor.u32 1.1754944e-38, %v835
        %v837 = vsel %vm834, %v836, %v832
        %v838 = vmul.f32 %v792, %v837
        %v839 = vrcp.pop %v805
        %v840 = vmul.f32 %v805, %v839
        %v841 = vsub.f32 1.0, %v840
        %v842 = vmul.f32 %v839, %v841
        %v843 = vadd.f32 %v839, %v842
        %vm844 = vweird.f32 %v805
        %vm845 = vweird.f32 %v839
        %vm846 = vmor %vm844, %vm845
        %v847 = vsel %vm846, %v839, %v843
        %v848 = vand.u32 2147483647, %v805
        %vm849 = vcmp.eq.f32.partialorder %v848, 8.507059e+37
        %v850 = vand.u32 %v805, 2147483648
        %v851 = vor.u32 1.1754944e-38, %v850
        %v852 = vsel %vm849, %v851, %v847
        %v853 = vmul.f32 %v794, %v852
        %v854 = vrcp.pop %v808
        %v855 = vmul.f32 %v808, %v854
        %v856 = vsub.f32 1.0, %v855
        %v857 = vmul.f32 %v854, %v856
        %v858 = vadd.f32 %v854, %v857
        %vm859 = vweird.f32 %v808
        %vm860 = vweird.f32 %v854
        %vm861 = vmor %vm859, %vm860
        %v862 = vsel %vm861, %v854, %v858
        %v863 = vand.u32 2147483647, %v808
        %vm864 = vcmp.eq.f32.partialorder %v863, 8.507059e+37
        %v865 = vand.u32 %v808, 2147483648
        %v866 = vor.u32 1.1754944e-38, %v865
        %v867 = vsel %vm864, %v866, %v862
        %v868 = vmul.f32 %v796, %v867
        %v870 = vsel %vm657, %v823, 0
        %872 = vmatpush.msra.mxu0 0.0
        %873 = vmatpush.msra.mxu0 0.0
        %874 = vmatpush.msra.mxu0 0.0
        %875 = vmatpush.msra.mxu0 0.0
        %876 = vmatpush.msra.mxu0 0.0
        %877 = vmatpush.msra.mxu0 0.0
        %878 = vmatpush.msra.mxu0 0.0
        %879 = vmatpush.msra.mxu0 0.0
        %880 = vmatpush.msra.mxu0 0.0
        %881 = vmatpush.msra.mxu0 0.0
        %882 = vmatpush.msra.mxu0 0.0
        %883 = vmatpush.msra.mxu0 0.0
        %884 = vmatpush.msra.mxu0 0.0
        %885 = vmatpush.msra.mxu0 0.0
        %886 = vmatpush.msra.mxu0 0.0
        %887 = vmatpush.msra.mxu0 %v595
        %888 = vmatmul.f32.gmra.mxu0 %v870
        %v889 = vpop.f32.mrf.mxu0
        %v890 = vadd.f32 0.0, %v889
        %891 = vdwg.mxu0
        %v893 = vsel %vm657, %v838, 0
        %895 = vmatpush.msra.mxu0 0.0
        %896 = vmatpush.msra.mxu0 0.0
        %897 = vmatpush.msra.mxu0 0.0
        %898 = vmatpush.msra.mxu0 0.0
        %899 = vmatpush.msra.mxu0 0.0
        %900 = vmatpush.msra.mxu0 0.0
        %901 = vmatpush.msra.mxu0 0.0
        %902 = vmatpush.msra.mxu0 0.0
        %903 = vmatpush.msra.mxu0 0.0
        %904 = vmatpush.msra.mxu0 0.0
        %905 = vmatpush.msra.mxu0 0.0
        %906 = vmatpush.msra.mxu0 0.0
        %907 = vmatpush.msra.mxu0 0.0
        %908 = vmatpush.msra.mxu0 0.0
        %909 = vmatpush.msra.mxu0 0.0
        %910 = vmatpush.msra.mxu0 %v615
        %911 = vmatmul.f32.gmra.mxu0 %v893
        %v912 = vpop.f32.mrf.mxu0
        %v913 = vadd.f32 0.0, %v912
        %914 = vdwg.mxu0
        %v916 = vsel %vm657, %v853, 0
        %918 = vmatpush.msra.mxu0 0.0
        %919 = vmatpush.msra.mxu0 0.0
        %920 = vmatpush.msra.mxu0 0.0
        %921 = vmatpush.msra.mxu0 0.0
        %922 = vmatpush.msra.mxu0 0.0
        %923 = vmatpush.msra.mxu0 0.0
        %924 = vmatpush.msra.mxu0 0.0
        %925 = vmatpush.msra.mxu0 0.0
        %926 = vmatpush.msra.mxu0 0.0
        %927 = vmatpush.msra.mxu0 0.0
        %928 = vmatpush.msra.mxu0 0.0
        %929 = vmatpush.msra.mxu0 0.0
        %930 = vmatpush.msra.mxu0 0.0
        %931 = vmatpush.msra.mxu0 0.0
        %932 = vmatpush.msra.mxu0 0.0
        %933 = vmatpush.msra.mxu0 %v635
        %934 = vmatmul.f32.gmra.mxu0 %v916
        %v935 = vpop.f32.mrf.mxu0
        %v936 = vadd.f32 0.0, %v935
        %937 = vdwg.mxu0
        %v939 = vsel %vm657, %v868, 0
        %941 = vmatpush.msra.mxu0 0.0
        %942 = vmatpush.msra.mxu0 0.0
        %943 = vmatpush.msra.mxu0 0.0
        %944 = vmatpush.msra.mxu0 0.0
        %945 = vmatpush.msra.mxu0 0.0
        %946 = vmatpush.msra.mxu0 0.0
        %947 = vmatpush.msra.mxu0 0.0
        %948 = vmatpush.msra.mxu0 0.0
        %949 = vmatpush.msra.mxu0 0.0
        %950 = vmatpush.msra.mxu0 0.0
        %951 = vmatpush.msra.mxu0 0.0
        %952 = vmatpush.msra.mxu0 0.0
        %953 = vmatpush.msra.mxu0 0.0
        %954 = vmatpush.msra.mxu0 0.0
        %955 = vmatpush.msra.mxu0 0.0
        %956 = vmatpush.msra.mxu0 %v655
        %957 = vmatmul.f32.gmra.mxu0 %v939
        %v958 = vpop.f32.mrf.mxu0
        %v959 = vadd.f32 0.0, %v958
        %960 = vdwg.mxu0
        %v961 = vld [vmem:[%s4] sm:$0xff]
        %v962 = vld [vmem:[%s4 + $0x8] sm:$0xff]
        %v963 = vld [vmem:[%s4 + $0x10] sm:$0xff]
        %v964 = vld [vmem:[%s4 + $0x18] sm:$0xff]
        %v966 = vsel %vm657, %v890, 0
        %968 = vmatpush.msra.mxu0 0.0
        %969 = vmatpush.msra.mxu0 0.0
        %970 = vmatpush.msra.mxu0 0.0
        %971 = vmatpush.msra.mxu0 0.0
        %972 = vmatpush.msra.mxu0 0.0
        %973 = vmatpush.msra.mxu0 0.0
        %974 = vmatpush.msra.mxu0 0.0
        %975 = vmatpush.msra.mxu0 0.0
        %976 = vmatpush.msra.mxu0 0.0
        %977 = vmatpush.msra.mxu0 0.0
        %978 = vmatpush.msra.mxu0 0.0
        %979 = vmatpush.msra.mxu0 0.0
        %980 = vmatpush.msra.mxu0 0.0
        %981 = vmatpush.msra.mxu0 0.0
        %982 = vmatpush.msra.mxu0 0.0
        %983 = vmatpush.msra.mxu0 %v961
        %984 = vmatmul.f32.gmra.mxu0 %v966
        %v985 = vpop.f32.mrf.mxu0
        %v986 = vadd.f32 0.0, %v985
        %987 = vdwg.mxu0
        %v989 = vsel %vm657, %v913, 0
        %991 = vmatpush.msra.mxu0 0.0
        %992 = vmatpush.msra.mxu0 0.0
        %993 = vmatpush.msra.mxu0 0.0
        %994 = vmatpush.msra.mxu0 0.0
        %995 = vmatpush.msra.mxu0 0.0
        %996 = vmatpush.msra.mxu0 0.0
        %997 = vmatpush.msra.mxu0 0.0
        %998 = vmatpush.msra.mxu0 0.0
        %999 = vmatpush.msra.mxu0 0.0
        %1000 = vmatpush.msra.mxu0 0.0
        %1001 = vmatpush.msra.mxu0 0.0
        %1002 = vmatpush.msra.mxu0 0.0
        %1003 = vmatpush.msra.mxu0 0.0
        %1004 = vmatpush.msra.mxu0 0.0
        %1005 = vmatpush.msra.mxu0 0.0
        %1006 = vmatpush.msra.mxu0 %v962
        %1007 = vmatmul.f32.gmra.mxu0 %v989
        %v1008 = vpop.f32.mrf.mxu0
        %v1009 = vadd.f32 0.0, %v1008
        %1010 = vdwg.mxu0
        %v1012 = vsel %vm657, %v936, 0
        %1014 = vmatpush.msra.mxu0 0.0
        %1015 = vmatpush.msra.mxu0 0.0
        %1016 = vmatpush.msra.mxu0 0.0
        %1017 = vmatpush.msra.mxu0 0.0
        %1018 = vmatpush.msra.mxu0 0.0
        %1019 = vmatpush.msra.mxu0 0.0
        %1020 = vmatpush.msra.mxu0 0.0
        %1021 = vmatpush.msra.mxu0 0.0
        %1022 = vmatpush.msra.mxu0 0.0
        %1023 = vmatpush.msra.mxu0 0.0
        %1024 = vmatpush.msra.mxu0 0.0
        %1025 = vmatpush.msra.mxu0 0.0
        %1026 = vmatpush.msra.mxu0 0.0
        %1027 = vmatpush.msra.mxu0 0.0
        %1028 = vmatpush.msra.mxu0 0.0
        %1029 = vmatpush.msra.mxu0 %v963
        %1030 = vmatmul.f32.gmra.mxu0 %v1012
        %v1031 = vpop.f32.mrf.mxu0
        %v1032 = vadd.f32 0.0, %v1031
        %1033 = vdwg.mxu0
        %v1035 = vsel %vm657, %v959, 0
        %1037 = vmatpush.msra.mxu0 0.0
        %1038 = vmatpush.msra.mxu0 0.0
        %1039 = vmatpush.msra.mxu0 0.0
        %1040 = vmatpush.msra.mxu0 0.0
        %1041 = vmatpush.msra.mxu0 0.0
        %1042 = vmatpush.msra.mxu0 0.0
        %1043 = vmatpush.msra.mxu0 0.0
        %1044 = vmatpush.msra.mxu0 0.0
        %1045 = vmatpush.msra.mxu0 0.0
        %1046 = vmatpush.msra.mxu0 0.0
        %1047 = vmatpush.msra.mxu0 0.0
        %1048 = vmatpush.msra.mxu0 0.0
        %1049 = vmatpush.msra.mxu0 0.0
        %1050 = vmatpush.msra.mxu0 0.0
        %1051 = vmatpush.msra.mxu0 0.0
        %1052 = vmatpush.msra.mxu0 %v964
        %1053 = vmatmul.f32.gmra.mxu0 %v1035
        %v1054 = vpop.f32.mrf.mxu0
        %v1055 = vadd.f32 0.0, %v1054
        %1056 = vdwg.mxu0
        %v1057 = vadd.f32 %v986, %v1009
        %v1058 = vadd.f32 %v1057, %v1032
        %v1059 = vadd.f32 %v1058, %v1055
        %v1060 = vperm.slane %v353, 0
        %v1061 = vadd.f32 %v1059, %v1060
        %v1062 = vadd.f32 %v350, %v1061
        %v1063 = vsel %vm317, %v1062, 0.0
        %1064 = vadd.xlane.f32.xlu0 %v1063
        %v1065 = vpop.xlane.xlu0 %1064
        %v1066 = vmul.f32 %v1065, %v327
        %v1067 = vsub.f32 %v1062, %v1066
        %v1068 = vmul.f32 %v1067, %v1067
        %v1069 = vsel %vm317, %v1068, 0.0
        %1070 = vadd.xlane.f32.xlu0 %v1069
        %v1071 = vpop.xlane.xlu0 %1070
        %v1072 = vmul.f32 %v1071, %v327
        %v1073 = vadd.f32 %v1072, 1e-12
        %v1074 = vrsqrt.pop %v1073
        %v1075 = vmul.f32 %v1074, %v1073
        %v1076 = vmul.f32 %v1075, %v1074
        %v1077 = vmul.f32 0.5, %v1076
        %v1078 = vsub.f32 1.5, %v1077
        %v1079 = vmul.f32 %v1074, %v1078
        %vm1080 = vweird.f32 %v1073
        %vm1081 = vweird.f32 %v1074
        %vm1082 = vmor %vm1080, %vm1081
        %v1083 = vsel %vm1082, %v1074, %v1079
        %v1084 = vmul.f32 %v1067, %v1083
        %v1085 = vperm.slane %v353, 1
        %v1086 = vmul.f32 %v1084, %v1085
        %v1087 = vperm.slane %v353, 2
        %v1088 = vadd.f32 %v1086, %v1087
        %v1089 = vld [vmem:[%s5] sm:$0xff]
        %v1090 = vld [vmem:[%s5 + $0x8] sm:$0xff]
        %v1091 = vld [vmem:[%s5 + $0x10] sm:$0xff]
        %v1092 = vld [vmem:[%s5 + $0x18] sm:$0xff]
        %v1093 = vperm.slane %v353, 3
        %v1095 = vsel %vm317, %v1088, 0
        %1097 = vmatpush.msra.mxu0 0.0
        %1098 = vmatpush.msra.mxu0 0.0
        %1099 = vmatpush.msra.mxu0 0.0
        %1100 = vmatpush.msra.mxu0 0.0
        %1101 = vmatpush.msra.mxu0 0.0
        %1102 = vmatpush.msra.mxu0 0.0
        %1103 = vmatpush.msra.mxu0 0.0
        %1104 = vmatpush.msra.mxu0 0.0
        %1105 = vmatpush.msra.mxu0 0.0
        %1106 = vmatpush.msra.mxu0 0.0
        %1107 = vmatpush.msra.mxu0 0.0
        %1108 = vmatpush.msra.mxu0 0.0
        %1109 = vmatpush.msra.mxu0 %v1092
        %1110 = vmatpush.msra.mxu0 %v1091
        %1111 = vmatpush.msra.mxu0 %v1090
        %1112 = vmatpush.msra.mxu0 %v1089
        %1113 = vmatmul.f32.gmra.mxu0 %v1095
        %v1114 = vpop.f32.mrf.mxu0
        %v1115 = vadd.f32 %v1093, %v1114
        %1116 = vdwg.mxu0
        %v1117 = vmul.f32 %v1115, 0.5
        %v1118 = vmul.f32 %v1115, 0.70710677
        %v1119 = vand.u32 2147483647, %v1118
        %v1120 = vmul.f32 %v1119, 0.3275911
        %v1121 = vadd.f32 %v1120, 1.0
        %v1122 = vrcp.pop %v1121
        %v1123 = vmul.f32 %v1121, %v1122
        %v1124 = vsub.f32 1.0, %v1123
        %v1125 = vmul.f32 %v1122, %v1124
        %v1126 = vadd.f32 %v1122, %v1125
        %vm1127 = vweird.f32 %v1121
        %vm1128 = vweird.f32 %v1122
        %vm1129 = vmor %vm1127, %vm1128
        %v1130 = vsel %vm1129, %v1122, %v1126
        %v1131 = vand.u32 2147483647, %v1121
        %vm1132 = vcmp.eq.f32.partialorder %v1131, 8.507059e+37
        %v1133 = vand.u32 %v1121, 2147483648
        %v1134 = vor.u32 1.1754944e-38, %v1133
        %v1135 = vsel %vm1132, %v1134, %v1130
        %v1136 = vmul.f32 1.0, %v1135
        %v1137 = vmul.f32 %v1136, 1.0614054
        %v1138 = vadd.f32 %v1137, -1.4531521
        %v1139 = vmul.f32 %v1138, %v1136
        %v1140 = vadd.f32 %v1139, 1.4214138
        %v1141 = vmul.f32 %v1140, %v1136
        %v1142 = vadd.f32 %v1141, -0.28449672
        %v1143 = vmul.f32 %v1142, %v1136
        %v1144 = vadd.f32 %v1143, 0.2548296
        %v1145 = vmul.f32 %v1144, %v1136
        %v1146 = vsub.f32 0.0, %v1119
        %v1147 = vmul.f32 %v1146, %v1119
        %v1148 = vmul.f32 %v1147, 1.442695
        %v1149 = vpow.pop %v1148
        %v1150 = vmul.f32 %v1145, %v1149
        %v1151 = vsub.f32 1.0, %v1150
        %vm1152 = vcmp.ge.f32.partialorder %v1118, 0.0
        %v1153 = vsub.f32 0.0, %v1151
        %v1154 = vsel %vm1152, %v1151, %v1153
        %v1155 = vadd.f32 %v1154, 1.0
        %v1156 = vmul.f32 %v1117, %v1155
        %v1157 = vld [vmem:[%s6] sm:$0xff]
        %v1158 = vld [vmem:[%s6 + $0x8] sm:$0xff]
        %v1159 = vld [vmem:[%s6 + $0x10] sm:$0xff]
        %v1160 = vld [vmem:[%s6 + $0x18] sm:$0xff]
        %v1161 = vld [vmem:[%s6 + $0x20] sm:$0xff]
        %v1162 = vld [vmem:[%s6 + $0x28] sm:$0xff]
        %v1163 = vld [vmem:[%s6 + $0x30] sm:$0xff]
        %v1164 = vld [vmem:[%s6 + $0x38] sm:$0xff]
        %v1165 = vperm.slane %v353, 4
        %vm1166 = vcmask 523264
        %v1168 = vsel %vm1166, %v1156, 0
        %1170 = vmatpush.msra.mxu0 0.0
        %1171 = vmatpush.msra.mxu0 0.0
        %1172 = vmatpush.msra.mxu0 0.0
        %1173 = vmatpush.msra.mxu0 0.0
        %1174 = vmatpush.msra.mxu0 0.0
        %1175 = vmatpush.msra.mxu0 0.0
        %1176 = vmatpush.msra.mxu0 0.0
        %1177 = vmatpush.msra.mxu0 0.0
        %1178 = vmatpush.msra.mxu0 %v1164
        %1179 = vmatpush.msra.mxu0 %v1163
        %1180 = vmatpush.msra.mxu0 %v1162
        %1181 = vmatpush.msra.mxu0 %v1161
        %1182 = vmatpush.msra.mxu0 %v1160
        %1183 = vmatpush.msra.mxu0 %v1159
        %1184 = vmatpush.msra.mxu0 %v1158
        %1185 = vmatpush.msra.mxu0 %v1157
        %1186 = vmatmul.f32.gmra.mxu0 %v1168
        %v1187 = vpop.f32.mrf.mxu0
        %v1188 = vadd.f32 %v1165, %v1187
        %1189 = vdwg.mxu0
        %v1190 = vadd.f32 %v1088, %v1188
        %v1191 = vsel %vm317, %v1190, 0.0
        %1192 = vadd.xlane.f32.xlu0 %v1191
        %v1193 = vpop.xlane.xlu0 %1192
        %v1194 = vmul.f32 %v1193, %v327
        %v1195 = vsub.f32 %v1190, %v1194
        %v1196 = vmul.f32 %v1195, %v1195
        %v1197 = vsel %vm317, %v1196, 0.0
        %1198 = vadd.xlane.f32.xlu0 %v1197
        %v1199 = vpop.xlane.xlu0 %1198
        %v1200 = vmul.f32 %v1199, %v327
        %v1201 = vadd.f32 %v1200, 1e-12
        %v1202 = vrsqrt.pop %v1201
        %v1203 = vmul.f32 %v1202, %v1201
        %v1204 = vmul.f32 %v1203, %v1202
        %v1205 = vmul.f32 0.5, %v1204
        %v1206 = vsub.f32 1.5, %v1205
        %v1207 = vmul.f32 %v1202, %v1206
        %vm1208 = vweird.f32 %v1201
        %vm1209 = vweird.f32 %v1202
        %vm1210 = vmor %vm1208, %vm1209
        %v1211 = vsel %vm1210, %v1202, %v1207
        %v1212 = vmul.f32 %v1195, %v1211
        %v1213 = vperm.slane %v353, 5
        %v1214 = vmul.f32 %v1212, %v1213
        %v1215 = vperm.slane %v353, 6
        %v1216 = vadd.f32 %v1214, %v1215
        %s1217 = scalar_lea.vmem %s7, 16
        %v1218 = vld [vmem:[%s1217] sm:$0xff]
        %s1219 = scalar_lea.vmem %s2, 384
        %v1220 = vld [vmem:[%s1219] sm:$0xff]
        %v1221 = vld [vmem:[%s1219 + $0x8] sm:$0xff]
        %v1222 = vld [vmem:[%s1219 + $0x10] sm:$0xff]
        %v1223 = vld [vmem:[%s1219 + $0x18] sm:$0xff]
        %v1224 = vld [vmem:[%s1219 + $0x20] sm:$0xff]
        %v1225 = vld [vmem:[%s1219 + $0x28] sm:$0xff]
        %v1226 = vld [vmem:[%s1219 + $0x30] sm:$0xff]
        %v1227 = vld [vmem:[%s1219 + $0x38] sm:$0xff]
        %v1228 = vld [vmem:[%s1219 + $0x40] sm:$0xff]
        %v1229 = vld [vmem:[%s1219 + $0x48] sm:$0xff]
        %v1230 = vld [vmem:[%s1219 + $0x50] sm:$0xff]
        %v1231 = vld [vmem:[%s1219 + $0x58] sm:$0xff]
        %v1232 = vld [vmem:[%s1219 + $0x60] sm:$0xff]
        %v1233 = vld [vmem:[%s1219 + $0x68] sm:$0xff]
        %v1234 = vld [vmem:[%s1219 + $0x70] sm:$0xff]
        %v1235 = vld [vmem:[%s1219 + $0x78] sm:$0xff]
        %v1236 = vld [vmem:[%s1219 + $0x80] sm:$0xff]
        %v1237 = vld [vmem:[%s1219 + $0x88] sm:$0xff]
        %v1238 = vld [vmem:[%s1219 + $0x90] sm:$0xff]
        %v1239 = vld [vmem:[%s1219 + $0x98] sm:$0xff]
        %v1240 = vld [vmem:[%s1219 + $0xa0] sm:$0xff]
        %v1241 = vld [vmem:[%s1219 + $0xa8] sm:$0xff]
        %v1242 = vld [vmem:[%s1219 + $0xb0] sm:$0xff]
        %v1243 = vld [vmem:[%s1219 + $0xb8] sm:$0xff]
        %v1244 = vld [vmem:[%s1219 + $0xc0] sm:$0xff]
        %v1245 = vld [vmem:[%s1219 + $0xc8] sm:$0xff]
        %v1246 = vld [vmem:[%s1219 + $0xd0] sm:$0xff]
        %v1247 = vld [vmem:[%s1219 + $0xd8] sm:$0xff]
        %v1248 = vld [vmem:[%s1219 + $0xe0] sm:$0xff]
        %v1249 = vld [vmem:[%s1219 + $0xe8] sm:$0xff]
        %v1250 = vld [vmem:[%s1219 + $0xf0] sm:$0xff]
        %v1251 = vld [vmem:[%s1219 + $0xf8] sm:$0xff]
        %v1252 = vld [vmem:[%s1219 + $0x100] sm:$0xff]
        %v1253 = vld [vmem:[%s1219 + $0x108] sm:$0xff]
        %v1254 = vld [vmem:[%s1219 + $0x110] sm:$0xff]
        %v1255 = vld [vmem:[%s1219 + $0x118] sm:$0xff]
        %v1256 = vld [vmem:[%s1219 + $0x120] sm:$0xff]
        %v1257 = vld [vmem:[%s1219 + $0x128] sm:$0xff]
        %v1258 = vld [vmem:[%s1219 + $0x130] sm:$0xff]
        %v1259 = vld [vmem:[%s1219 + $0x138] sm:$0xff]
        %v1260 = vld [vmem:[%s1219 + $0x140] sm:$0xff]
        %v1261 = vld [vmem:[%s1219 + $0x148] sm:$0xff]
        %v1262 = vld [vmem:[%s1219 + $0x150] sm:$0xff]
        %v1263 = vld [vmem:[%s1219 + $0x158] sm:$0xff]
        %v1264 = vld [vmem:[%s1219 + $0x160] sm:$0xff]
        %v1265 = vld [vmem:[%s1219 + $0x168] sm:$0xff]
        %v1266 = vld [vmem:[%s1219 + $0x170] sm:$0xff]
        %v1267 = vld [vmem:[%s1219 + $0x178] sm:$0xff]
        %s1268 = scalar_lea.vmem %s3, 96
        %v1269 = vld [vmem:[%s1268] sm:$0xff]
        %v1270 = vld [vmem:[%s1268 + $0x8] sm:$0xff]
        %v1271 = vld [vmem:[%s1268 + $0x10] sm:$0xff]
        %v1272 = vld [vmem:[%s1268 + $0x18] sm:$0xff]
        %v1273 = vld [vmem:[%s1268 + $0x20] sm:$0xff]
        %v1274 = vld [vmem:[%s1268 + $0x28] sm:$0xff]
        %v1275 = vld [vmem:[%s1268 + $0x30] sm:$0xff]
        %v1276 = vld [vmem:[%s1268 + $0x38] sm:$0xff]
        %v1277 = vld [vmem:[%s1268 + $0x40] sm:$0xff]
        %v1278 = vld [vmem:[%s1268 + $0x48] sm:$0xff]
        %v1279 = vld [vmem:[%s1268 + $0x50] sm:$0xff]
        %v1280 = vld [vmem:[%s1268 + $0x58] sm:$0xff]
        %v1282 = vsel %vm317, %v1216, 0
        %1284 = vmatpush.msra.mxu0 0.0
        %1285 = vmatpush.msra.mxu0 0.0
        %1286 = vmatpush.msra.mxu0 0.0
        %1287 = vmatpush.msra.mxu0 0.0
        %1288 = vmatpush.msra.mxu0 0.0
        %1289 = vmatpush.msra.mxu0 0.0
        %1290 = vmatpush.msra.mxu0 0.0
        %1291 = vmatpush.msra.mxu0 0.0
        %1292 = vmatpush.msra.mxu0 0.0
        %1293 = vmatpush.msra.mxu0 0.0
        %1294 = vmatpush.msra.mxu0 0.0
        %1295 = vmatpush.msra.mxu0 0.0
        %1296 = vmatpush.msra.mxu0 %v1223
        %1297 = vmatpush.msra.mxu0 %v1222
        %1298 = vmatpush.msra.mxu0 %v1221
        %1299 = vmatpush.msra.mxu0 %v1220
        %1300 = vmatmul.f32.gmra.mxu0 %v1282
        %v1301 = vpop.f32.mrf.mxu0
        %v1302 = vadd.f32 %v1269, %v1301
        %1303 = vdwg.mxu0
        %1304 = vmatpush.msra.mxu0 0.0
        %1305 = vmatpush.msra.mxu0 0.0
        %1306 = vmatpush.msra.mxu0 0.0
        %1307 = vmatpush.msra.mxu0 0.0
        %1308 = vmatpush.msra.mxu0 0.0
        %1309 = vmatpush.msra.mxu0 0.0
        %1310 = vmatpush.msra.mxu0 0.0
        %1311 = vmatpush.msra.mxu0 0.0
        %1312 = vmatpush.msra.mxu0 0.0
        %1313 = vmatpush.msra.mxu0 0.0
        %1314 = vmatpush.msra.mxu0 0.0
        %1315 = vmatpush.msra.mxu0 0.0
        %1316 = vmatpush.msra.mxu0 %v1227
        %1317 = vmatpush.msra.mxu0 %v1226
        %1318 = vmatpush.msra.mxu0 %v1225
        %1319 = vmatpush.msra.mxu0 %v1224
        %1320 = vmatmul.f32.gmra.mxu0 %v1282
        %v1321 = vpop.f32.mrf.mxu0
        %v1322 = vadd.f32 %v1270, %v1321
        %1323 = vdwg.mxu0
        %1324 = vmatpush.msra.mxu0 0.0
        %1325 = vmatpush.msra.mxu0 0.0
        %1326 = vmatpush.msra.mxu0 0.0
        %1327 = vmatpush.msra.mxu0 0.0
        %1328 = vmatpush.msra.mxu0 0.0
        %1329 = vmatpush.msra.mxu0 0.0
        %1330 = vmatpush.msra.mxu0 0.0
        %1331 = vmatpush.msra.mxu0 0.0
        %1332 = vmatpush.msra.mxu0 0.0
        %1333 = vmatpush.msra.mxu0 0.0
        %1334 = vmatpush.msra.mxu0 0.0
        %1335 = vmatpush.msra.mxu0 0.0
        %1336 = vmatpush.msra.mxu0 %v1231
        %1337 = vmatpush.msra.mxu0 %v1230
        %1338 = vmatpush.msra.mxu0 %v1229
        %1339 = vmatpush.msra.mxu0 %v1228
        %1340 = vmatmul.f32.gmra.mxu0 %v1282
        %v1341 = vpop.f32.mrf.mxu0
        %v1342 = vadd.f32 %v1271, %v1341
        %1343 = vdwg.mxu0
        %1344 = vmatpush.msra.mxu0 0.0
        %1345 = vmatpush.msra.mxu0 0.0
        %1346 = vmatpush.msra.mxu0 0.0
        %1347 = vmatpush.msra.mxu0 0.0
        %1348 = vmatpush.msra.mxu0 0.0
        %1349 = vmatpush.msra.mxu0 0.0
        %1350 = vmatpush.msra.mxu0 0.0
        %1351 = vmatpush.msra.mxu0 0.0
        %1352 = vmatpush.msra.mxu0 0.0
        %1353 = vmatpush.msra.mxu0 0.0
        %1354 = vmatpush.msra.mxu0 0.0
        %1355 = vmatpush.msra.mxu0 0.0
        %1356 = vmatpush.msra.mxu0 %v1235
        %1357 = vmatpush.msra.mxu0 %v1234
        %1358 = vmatpush.msra.mxu0 %v1233
        %1359 = vmatpush.msra.mxu0 %v1232
        %1360 = vmatmul.f32.gmra.mxu0 %v1282
        %v1361 = vpop.f32.mrf.mxu0
        %v1362 = vadd.f32 %v1272, %v1361
        %1363 = vdwg.mxu0
        %1364 = vmatpush.msra.mxu0 0.0
        %1365 = vmatpush.msra.mxu0 0.0
        %1366 = vmatpush.msra.mxu0 0.0
        %1367 = vmatpush.msra.mxu0 0.0
        %1368 = vmatpush.msra.mxu0 0.0
        %1369 = vmatpush.msra.mxu0 0.0
        %1370 = vmatpush.msra.mxu0 0.0
        %1371 = vmatpush.msra.mxu0 0.0
        %1372 = vmatpush.msra.mxu0 0.0
        %1373 = vmatpush.msra.mxu0 0.0
        %1374 = vmatpush.msra.mxu0 0.0
        %1375 = vmatpush.msra.mxu0 0.0
        %1376 = vmatpush.msra.mxu0 %v1239
        %1377 = vmatpush.msra.mxu0 %v1238
        %1378 = vmatpush.msra.mxu0 %v1237
        %1379 = vmatpush.msra.mxu0 %v1236
        %1380 = vmatmul.f32.gmra.mxu0 %v1282
        %v1381 = vpop.f32.mrf.mxu0
        %v1382 = vadd.f32 %v1273, %v1381
        %1383 = vdwg.mxu0
        %1384 = vmatpush.msra.mxu0 0.0
        %1385 = vmatpush.msra.mxu0 0.0
        %1386 = vmatpush.msra.mxu0 0.0
        %1387 = vmatpush.msra.mxu0 0.0
        %1388 = vmatpush.msra.mxu0 0.0
        %1389 = vmatpush.msra.mxu0 0.0
        %1390 = vmatpush.msra.mxu0 0.0
        %1391 = vmatpush.msra.mxu0 0.0
        %1392 = vmatpush.msra.mxu0 0.0
        %1393 = vmatpush.msra.mxu0 0.0
        %1394 = vmatpush.msra.mxu0 0.0
        %1395 = vmatpush.msra.mxu0 0.0
        %1396 = vmatpush.msra.mxu0 %v1243
        %1397 = vmatpush.msra.mxu0 %v1242
        %1398 = vmatpush.msra.mxu0 %v1241
        %1399 = vmatpush.msra.mxu0 %v1240
        %1400 = vmatmul.f32.gmra.mxu0 %v1282
        %v1401 = vpop.f32.mrf.mxu0
        %v1402 = vadd.f32 %v1274, %v1401
        %1403 = vdwg.mxu0
        %1404 = vmatpush.msra.mxu0 0.0
        %1405 = vmatpush.msra.mxu0 0.0
        %1406 = vmatpush.msra.mxu0 0.0
        %1407 = vmatpush.msra.mxu0 0.0
        %1408 = vmatpush.msra.mxu0 0.0
        %1409 = vmatpush.msra.mxu0 0.0
        %1410 = vmatpush.msra.mxu0 0.0
        %1411 = vmatpush.msra.mxu0 0.0
        %1412 = vmatpush.msra.mxu0 0.0
        %1413 = vmatpush.msra.mxu0 0.0
        %1414 = vmatpush.msra.mxu0 0.0
        %1415 = vmatpush.msra.mxu0 0.0
        %1416 = vmatpush.msra.mxu0 %v1247
        %1417 = vmatpush.msra.mxu0 %v1246
        %1418 = vmatpush.msra.mxu0 %v1245
        %1419 = vmatpush.msra.mxu0 %v1244
        %1420 = vmatmul.f32.gmra.mxu0 %v1282
        %v1421 = vpop.f32.mrf.mxu0
        %v1422 = vadd.f32 %v1275, %v1421
        %1423 = vdwg.mxu0
        %1424 = vmatpush.msra.mxu0 0.0
        %1425 = vmatpush.msra.mxu0 0.0
        %1426 = vmatpush.msra.mxu0 0.0
        %1427 = vmatpush.msra.mxu0 0.0
        %1428 = vmatpush.msra.mxu0 0.0
        %1429 = vmatpush.msra.mxu0 0.0
        %1430 = vmatpush.msra.mxu0 0.0
        %1431 = vmatpush.msra.mxu0 0.0
        %1432 = vmatpush.msra.mxu0 0.0
        %1433 = vmatpush.msra.mxu0 0.0
        %1434 = vmatpush.msra.mxu0 0.0
        %1435 = vmatpush.msra.mxu0 0.0
        %1436 = vmatpush.msra.mxu0 %v1251
        %1437 = vmatpush.msra.mxu0 %v1250
        %1438 = vmatpush.msra.mxu0 %v1249
        %1439 = vmatpush.msra.mxu0 %v1248
        %1440 = vmatmul.f32.gmra.mxu0 %v1282
        %v1441 = vpop.f32.mrf.mxu0
        %v1442 = vadd.f32 %v1276, %v1441
        %1443 = vdwg.mxu0
        %1444 = vmatpush.msra.mxu0 0.0
        %1445 = vmatpush.msra.mxu0 0.0
        %1446 = vmatpush.msra.mxu0 0.0
        %1447 = vmatpush.msra.mxu0 0.0
        %1448 = vmatpush.msra.mxu0 0.0
        %1449 = vmatpush.msra.mxu0 0.0
        %1450 = vmatpush.msra.mxu0 0.0
        %1451 = vmatpush.msra.mxu0 0.0
        %1452 = vmatpush.msra.mxu0 0.0
        %1453 = vmatpush.msra.mxu0 0.0
        %1454 = vmatpush.msra.mxu0 0.0
        %1455 = vmatpush.msra.mxu0 0.0
        %1456 = vmatpush.msra.mxu0 %v1255
        %1457 = vmatpush.msra.mxu0 %v1254
        %1458 = vmatpush.msra.mxu0 %v1253
        %1459 = vmatpush.msra.mxu0 %v1252
        %1460 = vmatmul.f32.gmra.mxu0 %v1282
        %v1461 = vpop.f32.mrf.mxu0
        %v1462 = vadd.f32 %v1277, %v1461
        %1463 = vdwg.mxu0
        %1464 = vmatpush.msra.mxu0 0.0
        %1465 = vmatpush.msra.mxu0 0.0
        %1466 = vmatpush.msra.mxu0 0.0
        %1467 = vmatpush.msra.mxu0 0.0
        %1468 = vmatpush.msra.mxu0 0.0
        %1469 = vmatpush.msra.mxu0 0.0
        %1470 = vmatpush.msra.mxu0 0.0
        %1471 = vmatpush.msra.mxu0 0.0
        %1472 = vmatpush.msra.mxu0 0.0
        %1473 = vmatpush.msra.mxu0 0.0
        %1474 = vmatpush.msra.mxu0 0.0
        %1475 = vmatpush.msra.mxu0 0.0
        %1476 = vmatpush.msra.mxu0 %v1259
        %1477 = vmatpush.msra.mxu0 %v1258
        %1478 = vmatpush.msra.mxu0 %v1257
        %1479 = vmatpush.msra.mxu0 %v1256
        %1480 = vmatmul.f32.gmra.mxu0 %v1282
        %v1481 = vpop.f32.mrf.mxu0
        %v1482 = vadd.f32 %v1278, %v1481
        %1483 = vdwg.mxu0
        %1484 = vmatpush.msra.mxu0 0.0
        %1485 = vmatpush.msra.mxu0 0.0
        %1486 = vmatpush.msra.mxu0 0.0
        %1487 = vmatpush.msra.mxu0 0.0
        %1488 = vmatpush.msra.mxu0 0.0
        %1489 = vmatpush.msra.mxu0 0.0
        %1490 = vmatpush.msra.mxu0 0.0
        %1491 = vmatpush.msra.mxu0 0.0
        %1492 = vmatpush.msra.mxu0 0.0
        %1493 = vmatpush.msra.mxu0 0.0
        %1494 = vmatpush.msra.mxu0 0.0
        %1495 = vmatpush.msra.mxu0 0.0
        %1496 = vmatpush.msra.mxu0 %v1263
        %1497 = vmatpush.msra.mxu0 %v1262
        %1498 = vmatpush.msra.mxu0 %v1261
        %1499 = vmatpush.msra.mxu0 %v1260
        %1500 = vmatmul.f32.gmra.mxu0 %v1282
        %v1501 = vpop.f32.mrf.mxu0
        %v1502 = vadd.f32 %v1279, %v1501
        %1503 = vdwg.mxu0
        %1504 = vmatpush.msra.mxu0 0.0
        %1505 = vmatpush.msra.mxu0 0.0
        %1506 = vmatpush.msra.mxu0 0.0
        %1507 = vmatpush.msra.mxu0 0.0
        %1508 = vmatpush.msra.mxu0 0.0
        %1509 = vmatpush.msra.mxu0 0.0
        %1510 = vmatpush.msra.mxu0 0.0
        %1511 = vmatpush.msra.mxu0 0.0
        %1512 = vmatpush.msra.mxu0 0.0
        %1513 = vmatpush.msra.mxu0 0.0
        %1514 = vmatpush.msra.mxu0 0.0
        %1515 = vmatpush.msra.mxu0 0.0
        %1516 = vmatpush.msra.mxu0 %v1267
        %1517 = vmatpush.msra.mxu0 %v1266
        %1518 = vmatpush.msra.mxu0 %v1265
        %1519 = vmatpush.msra.mxu0 %v1264
        %1520 = vmatmul.f32.gmra.mxu0 %v1282
        %v1521 = vpop.f32.mrf.mxu0
        %v1522 = vadd.f32 %v1280, %v1521
        %1523 = vdwg.mxu0
        %v1525 = vsel %vm657, %v1302, 0
        %v1528 = vsel %vm657, %v1382, 0
        %1530 = vmatpush.xpose.msra.mxu0 0.0
        %1531 = vmatpush.xpose.msra.mxu0 0.0
        %1532 = vmatpush.xpose.msra.mxu0 0.0
        %1533 = vmatpush.xpose.msra.mxu0 0.0
        %1534 = vmatpush.xpose.msra.mxu0 0.0
        %1535 = vmatpush.xpose.msra.mxu0 0.0
        %1536 = vmatpush.xpose.msra.mxu0 0.0
        %1537 = vmatpush.xpose.msra.mxu0 0.0
        %1538 = vmatpush.xpose.msra.mxu0 0.0
        %1539 = vmatpush.xpose.msra.mxu0 0.0
        %1540 = vmatpush.xpose.msra.mxu0 0.0
        %1541 = vmatpush.xpose.msra.mxu0 0.0
        %1542 = vmatpush.xpose.msra.mxu0 0.0
        %1543 = vmatpush.xpose.msra.mxu0 0.0
        %1544 = vmatpush.xpose.msra.mxu0 0.0
        %1545 = vmatpush.xpose.msra.mxu0 %v1528
        %1546 = vmatmul.f32.gmra.mxu0 %v1525
        %v1547 = vpop.f32.mrf.mxu0
        %v1548 = vadd.f32 0.0, %v1547
        %1549 = vdwg.mxu0
        %v1551 = vsel %vm657, %v1322, 0
        %v1554 = vsel %vm657, %v1402, 0
        %1556 = vmatpush.xpose.msra.mxu0 0.0
        %1557 = vmatpush.xpose.msra.mxu0 0.0
        %1558 = vmatpush.xpose.msra.mxu0 0.0
        %1559 = vmatpush.xpose.msra.mxu0 0.0
        %1560 = vmatpush.xpose.msra.mxu0 0.0
        %1561 = vmatpush.xpose.msra.mxu0 0.0
        %1562 = vmatpush.xpose.msra.mxu0 0.0
        %1563 = vmatpush.xpose.msra.mxu0 0.0
        %1564 = vmatpush.xpose.msra.mxu0 0.0
        %1565 = vmatpush.xpose.msra.mxu0 0.0
        %1566 = vmatpush.xpose.msra.mxu0 0.0
        %1567 = vmatpush.xpose.msra.mxu0 0.0
        %1568 = vmatpush.xpose.msra.mxu0 0.0
        %1569 = vmatpush.xpose.msra.mxu0 0.0
        %1570 = vmatpush.xpose.msra.mxu0 0.0
        %1571 = vmatpush.xpose.msra.mxu0 %v1554
        %1572 = vmatmul.f32.gmra.mxu0 %v1551
        %v1573 = vpop.f32.mrf.mxu0
        %v1574 = vadd.f32 0.0, %v1573
        %1575 = vdwg.mxu0
        %v1577 = vsel %vm657, %v1342, 0
        %v1580 = vsel %vm657, %v1422, 0
        %1582 = vmatpush.xpose.msra.mxu0 0.0
        %1583 = vmatpush.xpose.msra.mxu0 0.0
        %1584 = vmatpush.xpose.msra.mxu0 0.0
        %1585 = vmatpush.xpose.msra.mxu0 0.0
        %1586 = vmatpush.xpose.msra.mxu0 0.0
        %1587 = vmatpush.xpose.msra.mxu0 0.0
        %1588 = vmatpush.xpose.msra.mxu0 0.0
        %1589 = vmatpush.xpose.msra.mxu0 0.0
        %1590 = vmatpush.xpose.msra.mxu0 0.0
        %1591 = vmatpush.xpose.msra.mxu0 0.0
        %1592 = vmatpush.xpose.msra.mxu0 0.0
        %1593 = vmatpush.xpose.msra.mxu0 0.0
        %1594 = vmatpush.xpose.msra.mxu0 0.0
        %1595 = vmatpush.xpose.msra.mxu0 0.0
        %1596 = vmatpush.xpose.msra.mxu0 0.0
        %1597 = vmatpush.xpose.msra.mxu0 %v1580
        %1598 = vmatmul.f32.gmra.mxu0 %v1577
        %v1599 = vpop.f32.mrf.mxu0
        %v1600 = vadd.f32 0.0, %v1599
        %1601 = vdwg.mxu0
        %v1603 = vsel %vm657, %v1362, 0
        %v1606 = vsel %vm657, %v1442, 0
        %1608 = vmatpush.xpose.msra.mxu0 0.0
        %1609 = vmatpush.xpose.msra.mxu0 0.0
        %1610 = vmatpush.xpose.msra.mxu0 0.0
        %1611 = vmatpush.xpose.msra.mxu0 0.0
        %1612 = vmatpush.xpose.msra.mxu0 0.0
        %1613 = vmatpush.xpose.msra.mxu0 0.0
        %1614 = vmatpush.xpose.msra.mxu0 0.0
        %1615 = vmatpush.xpose.msra.mxu0 0.0
        %1616 = vmatpush.xpose.msra.mxu0 0.0
        %1617 = vmatpush.xpose.msra.mxu0 0.0
        %1618 = vmatpush.xpose.msra.mxu0 0.0
        %1619 = vmatpush.xpose.msra.mxu0 0.0
        %1620 = vmatpush.xpose.msra.mxu0 0.0
        %1621 = vmatpush.xpose.msra.mxu0 0.0
        %1622 = vmatpush.xpose.msra.mxu0 0.0
        %1623 = vmatpush.xpose.msra.mxu0 %v1606
        %1624 = vmatmul.f32.gmra.mxu0 %v1603
        %v1625 = vpop.f32.mrf.mxu0
        %v1626 = vadd.f32 0.0, %v1625
        %1627 = vdwg.mxu0
        %v1628 = vmul.f32 %v1548, 0.35355338
        %v1629 = vmul.f32 %v1574, 0.35355338
        %v1630 = vmul.f32 %v1600, 0.35355338
        %v1631 = vmul.f32 %v1626, 0.35355338
        %v1632 = vadd.f32 %v1628, %v767
        %v1633 = vadd.f32 %v1629, %v767
        %v1634 = vadd.f32 %v1630, %v767
        %v1635 = vadd.f32 %v1631, %v767
        %v1636 = vsel %vm657, %v1632, -inf
        %1637 = vmax.xlane.f32.xlu0 %v1636
        %v1638 = vpop.xlane.xlu0 %1637
        %v1639 = vsel %vm657, %v1633, -inf
        %1640 = vmax.xlane.f32.xlu0 %v1639
        %v1641 = vpop.xlane.xlu0 %1640
        %v1642 = vsel %vm657, %v1634, -inf
        %1643 = vmax.xlane.f32.xlu0 %v1642
        %v1644 = vpop.xlane.xlu0 %1643
        %v1645 = vsel %vm657, %v1635, -inf
        %1646 = vmax.xlane.f32.xlu0 %v1645
        %v1647 = vpop.xlane.xlu0 %1646
        %v1648 = vsub.f32 %v1632, %v1638
        %v1649 = vsub.f32 %v1633, %v1641
        %v1650 = vsub.f32 %v1634, %v1644
        %v1651 = vsub.f32 %v1635, %v1647
        %v1652 = vmul.f32 %v1648, 1.442695
        %v1653 = vpow.pop %v1652
        %v1654 = vmul.f32 %v1649, 1.442695
        %v1655 = vpow.pop %v1654
        %v1656 = vmul.f32 %v1650, 1.442695
        %v1657 = vpow.pop %v1656
        %v1658 = vmul.f32 %v1651, 1.442695
        %v1659 = vpow.pop %v1658
        %v1660 = vsel %vm657, %v1653, 0.0
        %1661 = vadd.xlane.f32.xlu0 %v1660
        %v1662 = vpop.xlane.xlu0 %1661
        %v1663 = vsel %vm657, %v1655, 0.0
        %1664 = vadd.xlane.f32.xlu0 %v1663
        %v1665 = vpop.xlane.xlu0 %1664
        %v1666 = vsel %vm657, %v1657, 0.0
        %1667 = vadd.xlane.f32.xlu0 %v1666
        %v1668 = vpop.xlane.xlu0 %1667
        %v1669 = vsel %vm657, %v1659, 0.0
        %1670 = vadd.xlane.f32.xlu0 %v1669
        %v1671 = vpop.xlane.xlu0 %1670
        %v1672 = vrcp.pop %v1662
        %v1673 = vmul.f32 %v1662, %v1672
        %v1674 = vsub.f32 1.0, %v1673
        %v1675 = vmul.f32 %v1672, %v1674
        %v1676 = vadd.f32 %v1672, %v1675
        %vm1677 = vweird.f32 %v1662
        %vm1678 = vweird.f32 %v1672
        %vm1679 = vmor %vm1677, %vm1678
        %v1680 = vsel %vm1679, %v1672, %v1676
        %v1681 = vand.u32 2147483647, %v1662
        %vm1682 = vcmp.eq.f32.partialorder %v1681, 8.507059e+37
        %v1683 = vand.u32 %v1662, 2147483648
        %v1684 = vor.u32 1.1754944e-38, %v1683
        %v1685 = vsel %vm1682, %v1684, %v1680
        %v1686 = vmul.f32 %v1653, %v1685
        %v1687 = vrcp.pop %v1665
        %v1688 = vmul.f32 %v1665, %v1687
        %v1689 = vsub.f32 1.0, %v1688
        %v1690 = vmul.f32 %v1687, %v1689
        %v1691 = vadd.f32 %v1687, %v1690
        %vm1692 = vweird.f32 %v1665
        %vm1693 = vweird.f32 %v1687
        %vm1694 = vmor %vm1692, %vm1693
        %v1695 = vsel %vm1694, %v1687, %v1691
        %v1696 = vand.u32 2147483647, %v1665
        %vm1697 = vcmp.eq.f32.partialorder %v1696, 8.507059e+37
        %v1698 = vand.u32 %v1665, 2147483648
        %v1699 = vor.u32 1.1754944e-38, %v1698
        %v1700 = vsel %vm1697, %v1699, %v1695
        %v1701 = vmul.f32 %v1655, %v1700
        %v1702 = vrcp.pop %v1668
        %v1703 = vmul.f32 %v1668, %v1702
        %v1704 = vsub.f32 1.0, %v1703
        %v1705 = vmul.f32 %v1702, %v1704
        %v1706 = vadd.f32 %v1702, %v1705
        %vm1707 = vweird.f32 %v1668
        %vm1708 = vweird.f32 %v1702
        %vm1709 = vmor %vm1707, %vm1708
        %v1710 = vsel %vm1709, %v1702, %v1706
        %v1711 = vand.u32 2147483647, %v1668
        %vm1712 = vcmp.eq.f32.partialorder %v1711, 8.507059e+37
        %v1713 = vand.u32 %v1668, 2147483648
        %v1714 = vor.u32 1.1754944e-38, %v1713
        %v1715 = vsel %vm1712, %v1714, %v1710
        %v1716 = vmul.f32 %v1657, %v1715
        %v1717 = vrcp.pop %v1671
        %v1718 = vmul.f32 %v1671, %v1717
        %v1719 = vsub.f32 1.0, %v1718
        %v1720 = vmul.f32 %v1717, %v1719
        %v1721 = vadd.f32 %v1717, %v1720
        %vm1722 = vweird.f32 %v1671
        %vm1723 = vweird.f32 %v1717
        %vm1724 = vmor %vm1722, %vm1723
        %v1725 = vsel %vm1724, %v1717, %v1721
        %v1726 = vand.u32 2147483647, %v1671
        %vm1727 = vcmp.eq.f32.partialorder %v1726, 8.507059e+37
        %v1728 = vand.u32 %v1671, 2147483648
        %v1729 = vor.u32 1.1754944e-38, %v1728
        %v1730 = vsel %vm1727, %v1729, %v1725
        %v1731 = vmul.f32 %v1659, %v1730
        %v1733 = vsel %vm657, %v1686, 0
        %1735 = vmatpush.msra.mxu0 0.0
        %1736 = vmatpush.msra.mxu0 0.0
        %1737 = vmatpush.msra.mxu0 0.0
        %1738 = vmatpush.msra.mxu0 0.0
        %1739 = vmatpush.msra.mxu0 0.0
        %1740 = vmatpush.msra.mxu0 0.0
        %1741 = vmatpush.msra.mxu0 0.0
        %1742 = vmatpush.msra.mxu0 0.0
        %1743 = vmatpush.msra.mxu0 0.0
        %1744 = vmatpush.msra.mxu0 0.0
        %1745 = vmatpush.msra.mxu0 0.0
        %1746 = vmatpush.msra.mxu0 0.0
        %1747 = vmatpush.msra.mxu0 0.0
        %1748 = vmatpush.msra.mxu0 0.0
        %1749 = vmatpush.msra.mxu0 0.0
        %1750 = vmatpush.msra.mxu0 %v1462
        %1751 = vmatmul.f32.gmra.mxu0 %v1733
        %v1752 = vpop.f32.mrf.mxu0
        %v1753 = vadd.f32 0.0, %v1752
        %1754 = vdwg.mxu0
        %v1756 = vsel %vm657, %v1701, 0
        %1758 = vmatpush.msra.mxu0 0.0
        %1759 = vmatpush.msra.mxu0 0.0
        %1760 = vmatpush.msra.mxu0 0.0
        %1761 = vmatpush.msra.mxu0 0.0
        %1762 = vmatpush.msra.mxu0 0.0
        %1763 = vmatpush.msra.mxu0 0.0
        %1764 = vmatpush.msra.mxu0 0.0
        %1765 = vmatpush.msra.mxu0 0.0
        %1766 = vmatpush.msra.mxu0 0.0
        %1767 = vmatpush.msra.mxu0 0.0
        %1768 = vmatpush.msra.mxu0 0.0
        %1769 = vmatpush.msra.mxu0 0.0
        %1770 = vmatpush.msra.mxu0 0.0
        %1771 = vmatpush.msra.mxu0 0.0
        %1772 = vmatpush.msra.mxu0 0.0
        %1773 = vmatpush.msra.mxu0 %v1482
        %1774 = vmatmul.f32.gmra.mxu0 %v1756
        %v1775 = vpop.f32.mrf.mxu0
        %v1776 = vadd.f32 0.0, %v1775
        %1777 = vdwg.mxu0
        %v1779 = vsel %vm657, %v1716, 0
        %1781 = vmatpush.msra.mxu0 0.0
        %1782 = vmatpush.msra.mxu0 0.0
        %1783 = vmatpush.msra.mxu0 0.0
        %1784 = vmatpush.msra.mxu0 0.0
        %1785 = vmatpush.msra.mxu0 0.0
        %1786 = vmatpush.msra.mxu0 0.0
        %1787 = vmatpush.msra.mxu0 0.0
        %1788 = vmatpush.msra.mxu0 0.0
        %1789 = vmatpush.msra.mxu0 0.0
        %1790 = vmatpush.msra.mxu0 0.0
        %1791 = vmatpush.msra.mxu0 0.0
        %1792 = vmatpush.msra.mxu0 0.0
        %1793 = vmatpush.msra.mxu0 0.0
        %1794 = vmatpush.msra.mxu0 0.0
        %1795 = vmatpush.msra.mxu0 0.0
        %1796 = vmatpush.msra.mxu0 %v1502
        %1797 = vmatmul.f32.gmra.mxu0 %v1779
        %v1798 = vpop.f32.mrf.mxu0
        %v1799 = vadd.f32 0.0, %v1798
        %1800 = vdwg.mxu0
        %v1802 = vsel %vm657, %v1731, 0
        %1804 = vmatpush.msra.mxu0 0.0
        %1805 = vmatpush.msra.mxu0 0.0
        %1806 = vmatpush.msra.mxu0 0.0
        %1807 = vmatpush.msra.mxu0 0.0
        %1808 = vmatpush.msra.mxu0 0.0
        %1809 = vmatpush.msra.mxu0 0.0
        %1810 = vmatpush.msra.mxu0 0.0
        %1811 = vmatpush.msra.mxu0 0.0
        %1812 = vmatpush.msra.mxu0 0.0
        %1813 = vmatpush.msra.mxu0 0.0
        %1814 = vmatpush.msra.mxu0 0.0
        %1815 = vmatpush.msra.mxu0 0.0
        %1816 = vmatpush.msra.mxu0 0.0
        %1817 = vmatpush.msra.mxu0 0.0
        %1818 = vmatpush.msra.mxu0 0.0
        %1819 = vmatpush.msra.mxu0 %v1522
        %1820 = vmatmul.f32.gmra.mxu0 %v1802
        %v1821 = vpop.f32.mrf.mxu0
        %v1822 = vadd.f32 0.0, %v1821
        %1823 = vdwg.mxu0
        %s1824 = scalar_lea.vmem %s4, 32
        %v1825 = vld [vmem:[%s1824] sm:$0xff]
        %v1826 = vld [vmem:[%s1824 + $0x8] sm:$0xff]
        %v1827 = vld [vmem:[%s1824 + $0x10] sm:$0xff]
        %v1828 = vld [vmem:[%s1824 + $0x18] sm:$0xff]
        %v1830 = vsel %vm657, %v1753, 0
        %1832 = vmatpush.msra.mxu0 0.0
        %1833 = vmatpush.msra.mxu0 0.0
        %1834 = vmatpush.msra.mxu0 0.0
        %1835 = vmatpush.msra.mxu0 0.0
        %1836 = vmatpush.msra.mxu0 0.0
        %1837 = vmatpush.msra.mxu0 0.0
        %1838 = vmatpush.msra.mxu0 0.0
        %1839 = vmatpush.msra.mxu0 0.0
        %1840 = vmatpush.msra.mxu0 0.0
        %1841 = vmatpush.msra.mxu0 0.0
        %1842 = vmatpush.msra.mxu0 0.0
        %1843 = vmatpush.msra.mxu0 0.0
        %1844 = vmatpush.msra.mxu0 0.0
        %1845 = vmatpush.msra.mxu0 0.0
        %1846 = vmatpush.msra.mxu0 0.0
        %1847 = vmatpush.msra.mxu0 %v1825
        %1848 = vmatmul.f32.gmra.mxu0 %v1830
        %v1849 = vpop.f32.mrf.mxu0
        %v1850 = vadd.f32 0.0, %v1849
        %1851 = vdwg.mxu0
        %v1853 = vsel %vm657, %v1776, 0
        %1855 = vmatpush.msra.mxu0 0.0
        %1856 = vmatpush.msra.mxu0 0.0
        %1857 = vmatpush.msra.mxu0 0.0
        %1858 = vmatpush.msra.mxu0 0.0
        %1859 = vmatpush.msra.mxu0 0.0
        %1860 = vmatpush.msra.mxu0 0.0
        %1861 = vmatpush.msra.mxu0 0.0
        %1862 = vmatpush.msra.mxu0 0.0
        %1863 = vmatpush.msra.mxu0 0.0
        %1864 = vmatpush.msra.mxu0 0.0
        %1865 = vmatpush.msra.mxu0 0.0
        %1866 = vmatpush.msra.mxu0 0.0
        %1867 = vmatpush.msra.mxu0 0.0
        %1868 = vmatpush.msra.mxu0 0.0
        %1869 = vmatpush.msra.mxu0 0.0
        %1870 = vmatpush.msra.mxu0 %v1826
        %1871 = vmatmul.f32.gmra.mxu0 %v1853
        %v1872 = vpop.f32.mrf.mxu0
        %v1873 = vadd.f32 0.0, %v1872
        %1874 = vdwg.mxu0
        %v1876 = vsel %vm657, %v1799, 0
        %1878 = vmatpush.msra.mxu0 0.0
        %1879 = vmatpush.msra.mxu0 0.0
        %1880 = vmatpush.msra.mxu0 0.0
        %1881 = vmatpush.msra.mxu0 0.0
        %1882 = vmatpush.msra.mxu0 0.0
        %1883 = vmatpush.msra.mxu0 0.0
        %1884 = vmatpush.msra.mxu0 0.0
        %1885 = vmatpush.msra.mxu0 0.0
        %1886 = vmatpush.msra.mxu0 0.0
        %1887 = vmatpush.msra.mxu0 0.0
        %1888 = vmatpush.msra.mxu0 0.0
        %1889 = vmatpush.msra.mxu0 0.0
        %1890 = vmatpush.msra.mxu0 0.0
        %1891 = vmatpush.msra.mxu0 0.0
        %1892 = vmatpush.msra.mxu0 0.0
        %1893 = vmatpush.msra.mxu0 %v1827
        %1894 = vmatmul.f32.gmra.mxu0 %v1876
        %v1895 = vpop.f32.mrf.mxu0
        %v1896 = vadd.f32 0.0, %v1895
        %1897 = vdwg.mxu0
        %v1899 = vsel %vm657, %v1822, 0
        %1901 = vmatpush.msra.mxu0 0.0
        %1902 = vmatpush.msra.mxu0 0.0
        %1903 = vmatpush.msra.mxu0 0.0
        %1904 = vmatpush.msra.mxu0 0.0
        %1905 = vmatpush.msra.mxu0 0.0
        %1906 = vmatpush.msra.mxu0 0.0
        %1907 = vmatpush.msra.mxu0 0.0
        %1908 = vmatpush.msra.mxu0 0.0
        %1909 = vmatpush.msra.mxu0 0.0
        %1910 = vmatpush.msra.mxu0 0.0
        %1911 = vmatpush.msra.mxu0 0.0
        %1912 = vmatpush.msra.mxu0 0.0
        %1913 = vmatpush.msra.mxu0 0.0
        %1914 = vmatpush.msra.mxu0 0.0
        %1915 = vmatpush.msra.mxu0 0.0
        %1916 = vmatpush.msra.mxu0 %v1828
        %1917 = vmatmul.f32.gmra.mxu0 %v1899
        %v1918 = vpop.f32.mrf.mxu0
        %v1919 = vadd.f32 0.0, %v1918
        %1920 = vdwg.mxu0
        %v1921 = vadd.f32 %v1850, %v1873
        %v1922 = vadd.f32 %v1921, %v1896
        %v1923 = vadd.f32 %v1922, %v1919
        %v1924 = vperm.slane %v1218, 0
        %v1925 = vadd.f32 %v1923, %v1924
        %v1926 = vadd.f32 %v1216, %v1925
        %v1927 = vsel %vm317, %v1926, 0.0
        %1928 = vadd.xlane.f32.xlu0 %v1927
        %v1929 = vpop.xlane.xlu0 %1928
        %v1930 = vmul.f32 %v1929, %v327
        %v1931 = vsub.f32 %v1926, %v1930
        %v1932 = vmul.f32 %v1931, %v1931
        %v1933 = vsel %vm317, %v1932, 0.0
        %1934 = vadd.xlane.f32.xlu0 %v1933
        %v1935 = vpop.xlane.xlu0 %1934
        %v1936 = vmul.f32 %v1935, %v327
        %v1937 = vadd.f32 %v1936, 1e-12
        %v1938 = vrsqrt.pop %v1937
        %v1939 = vmul.f32 %v1938, %v1937
        %v1940 = vmul.f32 %v1939, %v1938
        %v1941 = vmul.f32 0.5, %v1940
        %v1942 = vsub.f32 1.5, %v1941
        %v1943 = vmul.f32 %v1938, %v1942
        %vm1944 = vweird.f32 %v1937
        %vm1945 = vweird.f32 %v1938
        %vm1946 = vmor %vm1944, %vm1945
        %v1947 = vsel %vm1946, %v1938, %v1943
        %v1948 = vmul.f32 %v1931, %v1947
        %v1949 = vperm.slane %v1218, 1
        %v1950 = vmul.f32 %v1948, %v1949
        %v1951 = vperm.slane %v1218, 2
        %v1952 = vadd.f32 %v1950, %v1951
        %s1953 = scalar_lea.vmem %s5, 32
        %v1954 = vld [vmem:[%s1953] sm:$0xff]
        %v1955 = vld [vmem:[%s1953 + $0x8] sm:$0xff]
        %v1956 = vld [vmem:[%s1953 + $0x10] sm:$0xff]
        %v1957 = vld [vmem:[%s1953 + $0x18] sm:$0xff]
        %v1958 = vperm.slane %v1218, 3
        %v1960 = vsel %vm317, %v1952, 0
        %1962 = vmatpush.msra.mxu0 0.0
        %1963 = vmatpush.msra.mxu0 0.0
        %1964 = vmatpush.msra.mxu0 0.0
        %1965 = vmatpush.msra.mxu0 0.0
        %1966 = vmatpush.msra.mxu0 0.0
        %1967 = vmatpush.msra.mxu0 0.0
        %1968 = vmatpush.msra.mxu0 0.0
        %1969 = vmatpush.msra.mxu0 0.0
        %1970 = vmatpush.msra.mxu0 0.0
        %1971 = vmatpush.msra.mxu0 0.0
        %1972 = vmatpush.msra.mxu0 0.0
        %1973 = vmatpush.msra.mxu0 0.0
        %1974 = vmatpush.msra.mxu0 %v1957
        %1975 = vmatpush.msra.mxu0 %v1956
        %1976 = vmatpush.msra.mxu0 %v1955
        %1977 = vmatpush.msra.mxu0 %v1954
        %1978 = vmatmul.f32.gmra.mxu0 %v1960
        %v1979 = vpop.f32.mrf.mxu0
        %v1980 = vadd.f32 %v1958, %v1979
        %1981 = vdwg.mxu0
        %v1982 = vmul.f32 %v1980, 0.5
        %v1983 = vmul.f32 %v1980, 0.70710677
        %v1984 = vand.u32 2147483647, %v1983
        %v1985 = vmul.f32 %v1984, 0.3275911
        %v1986 = vadd.f32 %v1985, 1.0
        %v1987 = vrcp.pop %v1986
        %v1988 = vmul.f32 %v1986, %v1987
        %v1989 = vsub.f32 1.0, %v1988
        %v1990 = vmul.f32 %v1987, %v1989
        %v1991 = vadd.f32 %v1987, %v1990
        %vm1992 = vweird.f32 %v1986
        %vm1993 = vweird.f32 %v1987
        %vm1994 = vmor %vm1992, %vm1993
        %v1995 = vsel %vm1994, %v1987, %v1991
        %v1996 = vand.u32 2147483647, %v1986
        %vm1997 = vcmp.eq.f32.partialorder %v1996, 8.507059e+37
        %v1998 = vand.u32 %v1986, 2147483648
        %v1999 = vor.u32 1.1754944e-38, %v1998
        %v2000 = vsel %vm1997, %v1999, %v1995
        %v2001 = vmul.f32 1.0, %v2000
        %v2002 = vmul.f32 %v2001, 1.0614054
        %v2003 = vadd.f32 %v2002, -1.4531521
        %v2004 = vmul.f32 %v2003, %v2001
        %v2005 = vadd.f32 %v2004, 1.4214138
        %v2006 = vmul.f32 %v2005, %v2001
        %v2007 = vadd.f32 %v2006, -0.28449672
        %v2008 = vmul.f32 %v2007, %v2001
        %v2009 = vadd.f32 %v2008, 0.2548296
        %v2010 = vmul.f32 %v2009, %v2001
        %v2011 = vsub.f32 0.0, %v1984
        %v2012 = vmul.f32 %v2011, %v1984
        %v2013 = vmul.f32 %v2012, 1.442695
        %v2014 = vpow.pop %v2013
        %v2015 = vmul.f32 %v2010, %v2014
        %v2016 = vsub.f32 1.0, %v2015
        %vm2017 = vcmp.ge.f32.partialorder %v1983, 0.0
        %v2018 = vsub.f32 0.0, %v2016
        %v2019 = vsel %vm2017, %v2016, %v2018
        %v2020 = vadd.f32 %v2019, 1.0
        %v2021 = vmul.f32 %v1982, %v2020
        %s2022 = scalar_lea.vmem %s6, 64
        %v2023 = vld [vmem:[%s2022] sm:$0xff]
        %v2024 = vld [vmem:[%s2022 + $0x8] sm:$0xff]
        %v2025 = vld [vmem:[%s2022 + $0x10] sm:$0xff]
        %v2026 = vld [vmem:[%s2022 + $0x18] sm:$0xff]
        %v2027 = vld [vmem:[%s2022 + $0x20] sm:$0xff]
        %v2028 = vld [vmem:[%s2022 + $0x28] sm:$0xff]
        %v2029 = vld [vmem:[%s2022 + $0x30] sm:$0xff]
        %v2030 = vld [vmem:[%s2022 + $0x38] sm:$0xff]
        %v2031 = vperm.slane %v1218, 4
        %v2033 = vsel %vm1166, %v2021, 0
        %2035 = vmatpush.msra.mxu0 0.0
        %2036 = vmatpush.msra.mxu0 0.0
        %2037 = vmatpush.msra.mxu0 0.0
        %2038 = vmatpush.msra.mxu0 0.0
        %2039 = vmatpush.msra.mxu0 0.0
        %2040 = vmatpush.msra.mxu0 0.0
        %2041 = vmatpush.msra.mxu0 0.0
        %2042 = vmatpush.msra.mxu0 0.0
        %2043 = vmatpush.msra.mxu0 %v2030
        %2044 = vmatpush.msra.mxu0 %v2029
        %2045 = vmatpush.msra.mxu0 %v2028
        %2046 = vmatpush.msra.mxu0 %v2027
        %2047 = vmatpush.msra.mxu0 %v2026
        %2048 = vmatpush.msra.mxu0 %v2025
        %2049 = vmatpush.msra.mxu0 %v2024
        %2050 = vmatpush.msra.mxu0 %v2023
        %2051 = vmatmul.f32.gmra.mxu0 %v2033
        %v2052 = vpop.f32.mrf.mxu0
        %v2053 = vadd.f32 %v2031, %v2052
        %2054 = vdwg.mxu0
        %v2055 = vadd.f32 %v1952, %v2053
        %v2056 = vsel %vm317, %v2055, 0.0
        %2057 = vadd.xlane.f32.xlu0 %v2056
        %v2058 = vpop.xlane.xlu0 %2057
        %v2059 = vmul.f32 %v2058, %v327
        %v2060 = vsub.f32 %v2055, %v2059
        %v2061 = vmul.f32 %v2060, %v2060
        %v2062 = vsel %vm317, %v2061, 0.0
        %2063 = vadd.xlane.f32.xlu0 %v2062
        %v2064 = vpop.xlane.xlu0 %2063
        %v2065 = vmul.f32 %v2064, %v327
        %v2066 = vadd.f32 %v2065, 1e-12
        %v2067 = vrsqrt.pop %v2066
        %v2068 = vmul.f32 %v2067, %v2066
        %v2069 = vmul.f32 %v2068, %v2067
        %v2070 = vmul.f32 0.5, %v2069
        %v2071 = vsub.f32 1.5, %v2070
        %v2072 = vmul.f32 %v2067, %v2071
        %vm2073 = vweird.f32 %v2066
        %vm2074 = vweird.f32 %v2067
        %vm2075 = vmor %vm2073, %vm2074
        %v2076 = vsel %vm2075, %v2067, %v2072
        %v2077 = vmul.f32 %v2060, %v2076
        %v2078 = vperm.slane %v1218, 5
        %v2079 = vmul.f32 %v2077, %v2078
        %v2080 = vperm.slane %v1218, 6
        %v2081 = vadd.f32 %v2079, %v2080
        %2082 = vst.msk [vmem:[%s307] sm:$0xff] %vm317, %v2081
        %s2083 = sand.u32 %s208, 1
        %s2084 = scalar_lea.sflag [#allocation3], %s2083
        %s2085 = sand.u32 %s208, 1
        %s2086 = smul.addr %s2085, 8
        %s2087 = scalar_lea.vmem [#allocation2], %s2086
        // Predicated region
        $region53: #{bert_forward.1} parent=51 // pred_check
          %p2088 = pneg %p218
        $region54: #{bert_forward.1} parent=51 // pred_check_branch
          %2090 = sbr.rel (%p2088) target = $region56
        $region55: #{bert_forward.1} parent=51 // pred_region
          %2092 = vsyncadd %s2084, 0
          %s2093 = smul.addr %s22, 8
          %s2094 = scalar_lea.hbm %s8, %s2093
          %s2096 = sshll.u32 %s2087, 4
          %s2097 = int_to_ptr.vmem [resolvable:$true] %s2096
          %s2098 = sshll.u32 %s2094, 4
          %s2099 = int_to_ptr.hbm [resolvable:$true] %s2098
          %2101 = dma.vmem_to_hbm [thread:$0]  %s2097, 128, %s2099, %s2084
        $region56: #{bert_forward.1} parent=51 // pred_fallthru
          _
      $region52: #{bert_forward.1} parent=5 // pred_fallthru
        _
      %p2102 = scmp.le.s32.totalorder 2, %s17
      // Predicated region
      $region57: #{bert_forward.1} parent=5 // pred_check
        %p2103 = pneg %p2102
      $region58: #{bert_forward.1} parent=5 // pred_check_branch
        %2105 = sbr.rel (%p2103) target = $region60
      $region59: #{bert_forward.1} parent=5 // pred_region
        %s2106 = ssub.s32 %s17, 2
        // Predicated region
        $region61: #{bert_forward.1} parent=59 // pred_check
          %p2107 = pneg %p224
        $region62: #{bert_forward.1} parent=59 // pred_check_branch
          %2109 = sbr.rel (%p2107) target = $region64
        $region63: #{bert_forward.1} parent=59 // pred_region
          %s2110 = sand.u32 %s209, 1
          %s2111 = scalar_lea.sflag [#allocation3], %s2110
          %s2112 = sand.u32 %s209, 1
          %s2113 = smul.addr %s2112, 8
          %s2114 = scalar_lea.vmem [#allocation2], %s2113
          %2116 = dma.done %s2111, 128
        $region64: #{bert_forward.1} parent=59 // pred_fallthru
          _
      $region60: #{bert_forward.1} parent=5 // pred_fallthru
        _
    $region6: #{bert_forward.1} parent=1 // loop_footer
      %s21 = sadd.s32 1, %s17
    $region7: #{bert_forward.1} parent=1 // loop_footer_branch
      %16 = sbr.rel target = $region3
    $region8: #{bert_forward.1} parent=1 // loop_exit
      _
    %2117 = vsyncpa [#allocation3], 1
    %s2118 = scalar_lea.sflag [#allocation3], 1
    %2119 = vsyncpa %s2118, 1

</llo_original>
